<compile_context>
chip_gen: v5e
topology: v5e:2x2
jax: 0.10.0
libtpu: 0.0.40
codegen_flags: <defaults>
</compile_context>

<pallas_src>
import math
from functools import partial

import jax
import jax.numpy as jnp
from jax.experimental import pallas as pl
from jax.experimental.pallas import tpu as pltpu


def _layernorm(x, w, b, eps=1e-5):
    mu = jnp.mean(x, axis=-1, keepdims=True)
    var = jnp.mean((x - mu) ** 2, axis=-1, keepdims=True)
    return (x - mu) * jax.lax.rsqrt(var + eps) * w + b


# ----------------------------------------------------------------------------- kernel ----
def trans_encoder_kernel(src_ref, base_ref, krow_ref, pe_ref,
                         enc_w_ref, enc_b_ref,
                         wqkv_ref, bqkv_ref, wo_ref, bo_ref,
                         ln1_w_ref, ln1_b_ref,
                         w1_ref, b1_ref, w2_ref, b2_ref,
                         ln2_w_ref, ln2_b_ref,
                         dec_w_ref, dec_b_ref,
                         out_ref, x_ref, amask_ref, *, nhead, head_dim):
    l = pl.program_id(1)
    nl = pl.num_programs(1)
    D = nhead * head_dim
    hd = head_dim

    # --- first layer step: input Linear(feature_dim -> d_model) + positional encoding,
    #     and the combined additive mask (built once per batch tile, not per layer).
    @pl.when(l == 0)
    def _():
        x0 = jnp.dot(src_ref[...].astype(jnp.bfloat16), enc_w_ref[...],
                     preferred_element_type=jnp.float32) + enc_b_ref[...]
        x_ref[...] = x0 + pe_ref[...]
        amask_ref[...] = base_ref[...] + krow_ref[0]     # [M,M] + [1,M]

    x = x_ref[...]                                        # [M, D] f32 activation carry
    amask = amask_ref[...]                                # [M, M] additive mask

    scale = 1.0 / math.sqrt(hd)
    xb = x.astype(jnp.bfloat16)

    # ---- multi-head self-attention ----
    # fused QKV projection: ONE [M,D]@[D,3D] MXU matmul
    qkv = jnp.dot(xb, wqkv_ref[0], preferred_element_type=jnp.float32) + bqkv_ref[0]
    q = (qkv[:, :D] * scale).astype(jnp.bfloat16)
    k = qkv[:, D:2 * D].astype(jnp.bfloat16)
    v = qkv[:, 2 * D:].astype(jnp.bfloat16)

    # heads batched into a single 3-D einsum pair (batch dim = head); batch elements within
    # the tile are kept independent by the block-diagonal part of `amask`.
    qh = jnp.stack([q[:, h * hd:(h + 1) * hd] for h in range(nhead)], axis=0)  # [H, M, hd]
    kh = jnp.stack([k[:, h * hd:(h + 1) * hd] for h in range(nhead)], axis=0)
    vh = jnp.stack([v[:, h * hd:(h + 1) * hd] for h in range(nhead)], axis=0)

    s = jnp.einsum("hqd,hkd->hqk", qh, kh,
                   preferred_element_type=jnp.float32) + amask[None]            # [H, M, M]
    s = s - jnp.max(s, axis=-1, keepdims=True)
    p = jnp.exp(s)
    p = p * pl.reciprocal(jnp.sum(p, axis=-1, keepdims=True), approx=True)
    ctx = jnp.einsum("hqk,hkd->hqd", p.astype(jnp.bfloat16), vh,
                     preferred_element_type=jnp.float32)                        # [H, M, hd]
    o = jnp.concatenate([ctx[h] for h in range(nhead)], axis=-1)                # [M, D]
    attn = jnp.dot(o.astype(jnp.bfloat16), wo_ref[0],
                   preferred_element_type=jnp.float32) + bo_ref[0]

    # post-LN residual 1
    x = _layernorm(x + attn, ln1_w_ref[0], ln1_b_ref[0])

    # ---- feed-forward (ReLU) ----
    ff = jnp.dot(x.astype(jnp.bfloat16), w1_ref[0],
                 preferred_element_type=jnp.float32) + b1_ref[0]
    ff = jnp.maximum(ff, 0.0)
    ff = jnp.dot(ff.astype(jnp.bfloat16), w2_ref[0],
                 preferred_element_type=jnp.float32) + b2_ref[0]

    # post-LN residual 2
    x = _layernorm(x + ff, ln2_w_ref[0], ln2_b_ref[0])
    x_ref[...] = x

    # --- last layer step: decoder Linear(d_model -> out_dim), lane-padded output ---
    @pl.when(l == nl - 1)
    def _():
        out_ref[...] = jnp.dot(x.astype(jnp.bfloat16), dec_w_ref[...],
                               preferred_element_type=jnp.float32) + dec_b_ref[...]
        # NOTE: could raise pipeline depth on w1/w2 with pipeline_mode=pl.Buffered(3) if
        # profiling shows exposed FFN-weight DMA (keep 2 on v7x where VMEM is tighter).


# ------------------------------------------------------------------------- parameters ----
def make_positional_encoding(d_model, max_len=5000):
    pos = jnp.arange(max_len, dtype=jnp.float32)[:, None]
    div = jnp.exp(jnp.arange(0, d_model, 2, dtype=jnp.float32) * (-math.log(10000.0) / d_model))
    pe = jnp.zeros((max_len, d_model), dtype=jnp.float32)
    pe = pe.at[:, 0::2].set(jnp.sin(pos * div))
    pe = pe.at[:, 1::2].set(jnp.cos(pos * div))
    return pe


def init_params(key, feature_dim, d_model, nhead, d_hid, nlayers, out_dim, max_len=128):
    """Deterministic synthetic parameters. Weights stored as [in, out] (pre-transposed)."""
    ks = jax.random.split(key, 4 + nlayers)
    u = lambda k, shape, a: jax.random.uniform(k, shape, jnp.float32, -a, a)
    initrange = 0.1

    params = {
        "enc_w": u(ks[0], (feature_dim, d_model), initrange),
        "enc_b": u(ks[1], (1, d_model), 1.0 / math.sqrt(feature_dim)),
        "dec_w": u(ks[2], (d_model, out_dim), initrange),
        "dec_b": jnp.zeros((1, out_dim), jnp.float32),
        "pe": make_positional_encoding(d_model, max_len),
    }

    xa = math.sqrt(6.0 / (2 * d_model))          # xavier-ish for in_proj
    wq, wk, wv, wo, w1, w2 = [], [], [], [], [], []
    for l in range(nlayers):
        kk = jax.random.split(ks[4 + l], 6)
        wq.append(u(kk[0], (d_model, d_model), xa))
        wk.append(u(kk[1], (d_model, d_model), xa))
        wv.append(u(kk[2], (d_model, d_model), xa))
        wo.append(u(kk[3], (d_model, d_model), 1.0 / math.sqrt(d_model)))
        w1.append(u(kk[4], (d_model, d_hid), 1.0 / math.sqrt(d_model)))
        w2.append(u(kk[5], (d_hid, d_model), 1.0 / math.sqrt(d_hid)))

    params.update({
        "wq": jnp.stack(wq), "wk": jnp.stack(wk), "wv": jnp.stack(wv), "wo": jnp.stack(wo),
        "bq": jnp.zeros((nlayers, 1, d_model), jnp.float32),
        "bk": jnp.zeros((nlayers, 1, d_model), jnp.float32),
        "bv": jnp.zeros((nlayers, 1, d_model), jnp.float32),
        "bo": jnp.zeros((nlayers, 1, d_model), jnp.float32),
        "w1": jnp.stack(w1), "b1": jnp.zeros((nlayers, 1, d_hid), jnp.float32),
        "w2": jnp.stack(w2), "b2": jnp.zeros((nlayers, 1, d_model), jnp.float32),
        "ln1_w": jnp.ones((nlayers, 1, d_model), jnp.float32),
        "ln1_b": jnp.zeros((nlayers, 1, d_model), jnp.float32),
        "ln2_w": jnp.ones((nlayers, 1, d_model), jnp.float32),
        "ln2_b": jnp.zeros((nlayers, 1, d_model), jnp.float32),
    })
    return params


# ----------------------------------------------------------------------------- wrapper ---
def _pick_b_tile(B, S, nhead):
    """Largest divisor t of B such that the fused [nhead, t*S, t*S] score tile stays small
    (<= ~8 MiB f32) and t*S <= 1024, preferring to leave >= 2 batch tiles on the parallel
    grid axis (feeds both v7x TensorCores) when B > 1. t*S must be sublane-aligned unless
    t == B (full-extent blocks are always legal)."""
    def ok(t):
        m = t * S
        return ((m % 8 == 0) or t == B) and m <= 1024 and nhead * m * m * 4 <= (8 << 20)
    divs = [d for d in range(1, B + 1) if B % d == 0 and ok(d)]
    if not divs:
        return B
    multi = [d for d in divs if B // d >= 2]
    return max(multi) if multi else max(divs)


def _vmem_limit_bytes():
    """Per-generation scoped-VMEM limit (64 MiB physical on v7x vs 128 MiB on v5e/v6e)."""
    try:
        cap = int(pltpu.get_tpu_info().vmem_capacity_bytes)
        if cap <= 0:
            cap = 64 * 1024 * 1024
    except Exception:
        cap = 64 * 1024 * 1024
    return max(32 * 1024 * 1024, min(cap * 5 // 8, 100 * 1024 * 1024))


def trans_encoder_forward(src, src_mask, key_mask, params, *, nhead, nlayers):
    # src: [B, feature_dim, seq]  (module transposes (1,2) before the encoder Linear)
    B, Fd, S = src.shape
    D = params["enc_w"].shape[1]
    out_dim = params["dec_w"].shape[1]
    d_hid = params["w1"].shape[2]
    assert D % nhead == 0
    head_dim = D // nhead

    b_tile = _pick_b_tile(B, S, nhead)
    nbt = B // b_tile
    M = b_tile * S

    # activations flattened to [B*S, F] so the kernel works on lane/sublane-friendly 2-D tiles
    x2d = jnp.transpose(src, (0, 2, 1)).astype(jnp.float32).reshape(B * S, Fd)

    # positional encoding tiled per batch element inside a tile -> plain [M, D] add in-kernel
    pe_t = jnp.tile(params["pe"][:S], (b_tile, 1))                               # [M, D]

    # block-diagonal base mask over the fused M axis: src_mask inside each batch element,
    # -1e9 across batch elements (keeps batch elements independent in the fused attention).
    smask = src_mask.astype(jnp.float32)
    row_b = jnp.arange(M) // S
    same = row_b[:, None] == row_b[None, :]
    base_mask = jnp.where(same, jnp.tile(smask, (b_tile, b_tile)),
                          jnp.float32(-1e9))                                     # [M, M]

    # key-padding additive row per batch tile: [nbt, 1, M]
    key_rows = jnp.where(key_mask, -1e9, 0.0).astype(jnp.float32).reshape(nbt, 1, M)

    # fused QKV weights / biases: [L, D, 3D], [L, 1, 3D]
    wqkv = jnp.concatenate([params["wq"], params["wk"], params["wv"]], axis=-1)
    bqkv = jnp.concatenate([params["bq"], params["bk"], params["bv"]], axis=-1)

    # lane-dense output: pad decoder to a multiple of 128 lanes, slice after the call
    O_pad = max(128, ((out_dim + 127) // 128) * 128)
    dec_w = jnp.zeros((D, O_pad), jnp.float32).at[:, :out_dim].set(params["dec_w"])
    dec_b = jnp.zeros((1, O_pad), jnp.float32).at[:, :out_dim].set(params["dec_b"])

    bf16 = lambda a: a.astype(jnp.bfloat16)

    const_in = [x2d, base_mask, key_rows, pe_t, bf16(params["enc_w"]), params["enc_b"]]
    layer_in = [bf16(wqkv), bqkv, bf16(params["wo"]), params["bo"],
                params["ln1_w"], params["ln1_b"],
                bf16(params["w1"]), params["b1"], bf16(params["w2"]), params["b2"],
                params["ln2_w"], params["ln2_b"]]
    tail_in = [bf16(dec_w), dec_b]
    inputs = const_in + layer_in + tail_in

    per_tile2 = lambda b, l: (b, 0)      # per-batch-tile 2-D blocks (constant across layers)
    per_tile3 = lambda b, l: (b, 0, 0)
    per_layer3 = lambda b, l: (l, 0, 0)  # per-layer streamed weights
    const2 = lambda b, l: (0, 0)         # grid-constant blocks

    in_specs = [
        pl.BlockSpec((M, Fd), per_tile2),                                     # src rows
        pl.BlockSpec((M, M), const2),                                         # base mask
        pl.BlockSpec((1, 1, M), per_tile3),                                   # key padding row
        pl.BlockSpec((M, D), const2),                                         # positional enc
        pl.BlockSpec((Fd, D), const2), pl.BlockSpec((1, D), const2),          # enc w/b
        pl.BlockSpec((1, D, 3 * D), per_layer3), pl.BlockSpec((1, 1, 3 * D), per_layer3),
        pl.BlockSpec((1, D, D), per_layer3), pl.BlockSpec((1, 1, D), per_layer3),
        pl.BlockSpec((1, 1, D), per_layer3), pl.BlockSpec((1, 1, D), per_layer3),
        pl.BlockSpec((1, D, d_hid), per_layer3), pl.BlockSpec((1, 1, d_hid), per_layer3),
        pl.BlockSpec((1, d_hid, D), per_layer3), pl.BlockSpec((1, 1, D), per_layer3),
        pl.BlockSpec((1, 1, D), per_layer3), pl.BlockSpec((1, 1, D), per_layer3),
        pl.BlockSpec((D, O_pad), const2), pl.BlockSpec((1, O_pad), const2),   # dec w/b
    ]

    # advisory cost estimate: per-layer weights are streamed once per BATCH TILE
    nbytes = lambda arrs: int(sum(int(a.size) * a.dtype.itemsize for a in arrs))
    flops = int(
        2 * B * S * Fd * D
        + 2 * B * S * D * O_pad
        + nlayers * B * S * (2 * D * 3 * D + 2 * D * D + 4 * D * d_hid)
        + nlayers * nbt * nhead * 4 * M * M * head_dim
    )
    cost = pl.CostEstimate(
        flops=flops,
        transcendentals=int(nlayers * nbt * nhead * M * M),
        bytes_accessed=nbytes(const_in) + nbytes(tail_in)
                       + nbt * nbytes(layer_in) + B * S * O_pad * 4,
    )

    kernel = partial(trans_encoder_kernel, nhead=nhead, head_dim=head_dim)

    out = pl.pallas_call(
        kernel,
        grid=(nbt, nlayers),
        in_specs=in_specs,
        out_specs=pl.BlockSpec((M, O_pad), per_tile2),
        out_shape=jax.ShapeDtypeStruct((B * S, O_pad), jnp.float32),
        scratch_shapes=[pltpu.VMEM((M, D), jnp.float32),    # activation carried across layers
                        pltpu.VMEM((M, M), jnp.float32)],   # combined additive mask
        compiler_params=pltpu.CompilerParams(
            dimension_semantics=("parallel", "arbitrary"),
            vmem_limit_bytes=_vmem_limit_bytes(),
        ),
        cost_estimate=cost,
    )(*inputs)
    return out.reshape(B, S, O_pad)[:, :, :out_dim]


# --------------------------------------------------------------------- pure-JAX reference
def trans_encoder_reference(src, src_mask, key_mask, params, *, nhead, nlayers):
    B, Fd, S = src.shape
    D = params["enc_w"].shape[1]
    hd = D // nhead
    x = jnp.transpose(src, (0, 2, 1)).astype(jnp.float32)
    x = x @ params["enc_w"] + params["enc_b"]
    x = x + params["pe"][:S][None]
    key_add = jnp.where(key_mask, -1e9, 0.0)[:, None, None, :]        # [B,1,1,S]
    mask = src_mask.astype(jnp.float32)[None, None] + key_add          # [B,1,S,S]
    heads = lambda t: jnp.transpose(t.reshape(B, S, nhead, hd), (0, 2, 1, 3))
    for l in range(nlayers):
        q = heads(x @ params["wq"][l] + params["bq"][l]) / math.sqrt(hd)
        k = heads(x @ params["wk"][l] + params["bk"][l])
        v = heads(x @ params["wv"][l] + params["bv"][l])
        s = jnp.einsum("bhqd,bhkd->bhqk", q, k) + mask
        p = jax.nn.softmax(s, axis=-1)
        ctx = jnp.einsum("bhqk,bhkd->bhqd", p, v)
        o = jnp.transpose(ctx, (0, 2, 1, 3)).reshape(B, S, D)
        attn = o @ params["wo"][l] + params["bo"][l]
        x = _layernorm(x + attn, params["ln1_w"][l], params["ln1_b"][l])
        ff = jnp.maximum(x @ params["w1"][l] + params["b1"][l], 0.0)
        ff = ff @ params["w2"][l] + params["b2"][l]
        x = _layernorm(x + ff, params["ln2_w"][l], params["ln2_b"][l])
    return x @ params["dec_w"] + params["dec_b"]


if __name__ == "__main__":
    # small shapes consistent with the module
    B, S = 2, 8
    feature_dim, d_model, nhead, d_hid, nlayers, out_dim = 4, 32, 4, 64, 2, 1

    key = jax.random.PRNGKey(0)
    k_src, k_par = jax.random.split(key)

    src = jax.random.normal(k_src, (B, feature_dim, S), dtype=jnp.float32)   # [B, feature_dim, seq]
    src_mask = jnp.zeros((S, S), dtype=jnp.float32)                          # additive attention mask
    key_mask = jnp.zeros((B, S), dtype=bool).at[1, S - 1].set(True)          # key padding mask

    params = init_params(k_par, feature_dim, d_model, nhead, d_hid, nlayers, out_dim)

    out = trans_encoder_forward(src, src_mask, key_mask, params, nhead=nhead, nlayers=nlayers)
    out = jax.block_until_ready(out)
    assert out.shape == (B, S, out_dim)
    assert bool(jnp.all(jnp.isfinite(out)))

    ref = trans_encoder_reference(src, src_mask, key_mask, params, nhead=nhead, nlayers=nlayers)
    ref = jax.block_until_ready(ref)
    # bf16 MXU inputs + approx softmax reciprocal vs full-f32 reference -> loose tolerance
    assert float(jnp.max(jnp.abs(out - ref))) < 1e-1

    print("KERNEL_OK")
</pallas_src>

<mosaic_0001>
module attributes {stable_mosaic.version = 11 : i64} {
  func.func @trans_encoder_kernel(%arg0: i32, %arg1: i32, %arg2: memref<8x4xf32, #tpu.memory_space<vmem>>, %arg3: memref<8x8xf32, #tpu.memory_space<vmem>>, %arg4: memref<1x1x8xf32, #tpu.memory_space<vmem>>, %arg5: memref<8x32xf32, #tpu.memory_space<vmem>>, %arg6: memref<4x32xbf16, #tpu.memory_space<vmem>>, %arg7: memref<1x32xf32, #tpu.memory_space<vmem>>, %arg8: memref<1x32x96xbf16, #tpu.memory_space<vmem>>, %arg9: memref<1x1x96xf32, #tpu.memory_space<vmem>>, %arg10: memref<1x32x32xbf16, #tpu.memory_space<vmem>>, %arg11: memref<1x1x32xf32, #tpu.memory_space<vmem>>, %arg12: memref<1x1x32xf32, #tpu.memory_space<vmem>>, %arg13: memref<1x1x32xf32, #tpu.memory_space<vmem>>, %arg14: memref<1x32x64xbf16, #tpu.memory_space<vmem>>, %arg15: memref<1x1x64xf32, #tpu.memory_space<vmem>>, %arg16: memref<1x64x32xbf16, #tpu.memory_space<vmem>>, %arg17: memref<1x1x32xf32, #tpu.memory_space<vmem>>, %arg18: memref<1x1x32xf32, #tpu.memory_space<vmem>>, %arg19: memref<1x1x32xf32, #tpu.memory_space<vmem>>, %arg20: memref<32x128xbf16, #tpu.memory_space<vmem>>, %arg21: memref<1x128xf32, #tpu.memory_space<vmem>>, %arg22: memref<8x128xf32, #tpu.memory_space<vmem>>, %arg23: memref<8x32xf32, #tpu.memory_space<vmem>>, %arg24: memref<8x8xf32, #tpu.memory_space<vmem>>) attributes {dimension_semantics = [#tpu.dimension_semantics<parallel>, #tpu.dimension_semantics<arbitrary>], iteration_bounds = array<i64: 2, 2>, scalar_prefetch = 0 : i64, scratch_operands = 2 : i64, tpu.core_type = #tpu.core_type<tc>, window_params = [{transform_indices = @transform_0, window_bounds = array<i64: 8, 4>}, {pipeline_mode = #tpu.pipeline_mode<synchronous>, transform_indices = @transform_1, window_bounds = array<i64: 8, 8>}, {transform_indices = @transform_2, window_bounds = array<i64: 1, 1, 8>}, {pipeline_mode = #tpu.pipeline_mode<synchronous>, transform_indices = @transform_3, window_bounds = array<i64: 8, 32>}, {pipeline_mode = #tpu.pipeline_mode<synchronous>, transform_indices = @transform_4, window_bounds = array<i64: 4, 32>}, {pipeline_mode = #tpu.pipeline_mode<synchronous>, transform_indices = @transform_5, window_bounds = array<i64: 1, 32>}, {transform_indices = @transform_6, window_bounds = array<i64: 1, 32, 96>}, {transform_indices = @transform_7, window_bounds = array<i64: 1, 1, 96>}, {transform_indices = @transform_8, window_bounds = array<i64: 1, 32, 32>}, {transform_indices = @transform_9, window_bounds = array<i64: 1, 1, 32>}, {transform_indices = @transform_10, window_bounds = array<i64: 1, 1, 32>}, {transform_indices = @transform_11, window_bounds = array<i64: 1, 1, 32>}, {transform_indices = @transform_12, window_bounds = array<i64: 1, 32, 64>}, {transform_indices = @transform_13, window_bounds = array<i64: 1, 1, 64>}, {transform_indices = @transform_14, window_bounds = array<i64: 1, 64, 32>}, {transform_indices = @transform_15, window_bounds = array<i64: 1, 1, 32>}, {transform_indices = @transform_16, window_bounds = array<i64: 1, 1, 32>}, {transform_indices = @transform_17, window_bounds = array<i64: 1, 1, 32>}, {pipeline_mode = #tpu.pipeline_mode<synchronous>, transform_indices = @transform_18, window_bounds = array<i64: 32, 128>}, {pipeline_mode = #tpu.pipeline_mode<synchronous>, transform_indices = @transform_19, window_bounds = array<i64: 1, 128>}, {transform_indices = @transform_20, window_bounds = array<i64: 8, 128>}]} {
    %c0_i32 = arith.constant 0 : i32
    %0 = arith.cmpi eq, %arg1, %c0_i32 : i32
    %1 = arith.extui %0 : i1 to i32
    %c0_i32_0 = arith.constant 0 : i32
    %2 = arith.cmpi ne, %1, %c0_i32_0 : i32
    scf.if %2 {
      %c0_62 = arith.constant 0 : index
      %c0_63 = arith.constant 0 : index
      %157 = vector.load %arg2[%c0_62, %c0_63] : memref<8x4xf32, #tpu.memory_space<vmem>>, vector<8x4xf32>
      %158 = arith.truncf %157 : vector<8x4xf32> to vector<8x4xbf16>
      %c0_64 = arith.constant 0 : index
      %c0_65 = arith.constant 0 : index
      %159 = vector.load %arg6[%c0_64, %c0_65] : memref<4x32xbf16, #tpu.memory_space<vmem>>, vector<4x32xbf16>
      %cst_66 = arith.constant dense<0.000000e+00> : vector<8x32xf32>
      %160 = tpu.matmul %158, %159, %cst_66 {dimension_numbers = #tpu.dot_dimension_numbers<[1], [0], [0], [1], [0, 0, 1, 1], [], []>} : vector<8x4xbf16>, vector<4x32xbf16>, vector<8x32xf32> -> vector<8x32xf32>
      %c0_67 = arith.constant 0 : index
      %c0_68 = arith.constant 0 : index
      %161 = vector.load %arg7[%c0_67, %c0_68] : memref<1x32xf32, #tpu.memory_space<vmem>>, vector<1x32xf32>
      %162 = vector.broadcast %161 : vector<1x32xf32> to vector<8x32xf32>
      %163 = arith.addf %160, %162 : vector<8x32xf32>
      %c0_69 = arith.constant 0 : index
      %c0_70 = arith.constant 0 : index
      %164 = vector.load %arg5[%c0_69, %c0_70] : memref<8x32xf32, #tpu.memory_space<vmem>>, vector<8x32xf32>
      %165 = arith.addf %163, %164 : vector<8x32xf32>
      %c0_71 = arith.constant 0 : index
      %c0_72 = arith.constant 0 : index
      %166 = vector.load %arg23[%c0_71, %c0_72] : memref<8x32xf32, #tpu.memory_space<vmem>>, vector<8x32xf32>
      tpu.vector_store %arg23[%c0_71, %c0_72], %165 {strides = array<i32>} : memref<8x32xf32, #tpu.memory_space<vmem>>, vector<8x32xf32>,
      %c0_73 = arith.constant 0 : index
      %c0_74 = arith.constant 0 : index
      %167 = vector.load %arg3[%c0_73, %c0_74] : memref<8x8xf32, #tpu.memory_space<vmem>>, vector<8x8xf32>
      %c0_75 = arith.constant 0 : index
      %c0_76 = arith.constant 0 : index
      %c0_77 = arith.constant 0 : index
      %168 = vector.load %arg4[%c0_75, %c0_76, %c0_77] : memref<1x1x8xf32, #tpu.memory_space<vmem>>, vector<1x1x8xf32>
      %169 = vector.shape_cast %168 : vector<1x1x8xf32> to vector<1x8xf32>
      %170 = vector.broadcast %169 : vector<1x8xf32> to vector<8x8xf32>
      %171 = arith.addf %167, %170 : vector<8x8xf32>
      %c0_78 = arith.constant 0 : index
      %c0_79 = arith.constant 0 : index
      %172 = vector.load %arg24[%c0_78, %c0_79] : memref<8x8xf32, #tpu.memory_space<vmem>>, vector<8x8xf32>
      tpu.vector_store %arg24[%c0_78, %c0_79], %171 {strides = array<i32>} : memref<8x8xf32, #tpu.memory_space<vmem>>, vector<8x8xf32>,
    } else {
    }
    %c0 = arith.constant 0 : index
    %c0_1 = arith.constant 0 : index
    %3 = vector.load %arg23[%c0, %c0_1] : memref<8x32xf32, #tpu.memory_space<vmem>>, vector<8x32xf32>
    %c0_2 = arith.constant 0 : index
    %c0_3 = arith.constant 0 : index
    %4 = vector.load %arg24[%c0_2, %c0_3] : memref<8x8xf32, #tpu.memory_space<vmem>>, vector<8x8xf32>
    %5 = arith.truncf %3 : vector<8x32xf32> to vector<8x32xbf16>
    %c0_4 = arith.constant 0 : index
    %c0_5 = arith.constant 0 : index
    %c0_6 = arith.constant 0 : index
    %6 = vector.load %arg8[%c0_4, %c0_5, %c0_6] : memref<1x32x96xbf16, #tpu.memory_space<vmem>>, vector<1x32x96xbf16>
    %7 = vector.shape_cast %6 : vector<1x32x96xbf16> to vector<32x96xbf16>
    %cst = arith.constant dense<0.000000e+00> : vector<8x96xf32>
    %8 = tpu.matmul %5, %7, %cst {dimension_numbers = #tpu.dot_dimension_numbers<[1], [0], [0], [1], [0, 0, 1, 1], [], []>} : vector<8x32xbf16>, vector<32x96xbf16>, vector<8x96xf32> -> vector<8x96xf32>
    %c0_7 = arith.constant 0 : index
    %c0_8 = arith.constant 0 : index
    %c0_9 = arith.constant 0 : index
    %9 = vector.load %arg9[%c0_7, %c0_8, %c0_9] : memref<1x1x96xf32, #tpu.memory_space<vmem>>, vector<1x1x96xf32>
    %10 = vector.shape_cast %9 : vector<1x1x96xf32> to vector<1x96xf32>
    %11 = vector.broadcast %10 : vector<1x96xf32> to vector<8x96xf32>
    %12 = arith.addf %8, %11 : vector<8x96xf32>
    %13 = vector.extract_strided_slice %12 {offsets = [0, 0], sizes = [8, 32], strides = [1, 1]} : vector<8x96xf32> to vector<8x32xf32>
    %cst_10 = arith.constant 0.353553385 : f32
    %14 = vector.broadcast %cst_10 : f32 to vector<8x32xf32>
    %15 = arith.mulf %13, %14 : vector<8x32xf32>
    %16 = arith.truncf %15 : vector<8x32xf32> to vector<8x32xbf16>
    %17 = vector.extract_strided_slice %12 {offsets = [0, 32], sizes = [8, 32], strides = [1, 1]} : vector<8x96xf32> to vector<8x32xf32>
    %18 = arith.truncf %17 : vector<8x32xf32> to vector<8x32xbf16>
    %19 = vector.extract_strided_slice %12 {offsets = [0, 64], sizes = [8, 32], strides = [1, 1]} : vector<8x96xf32> to vector<8x32xf32>
    %20 = arith.truncf %19 : vector<8x32xf32> to vector<8x32xbf16>
    %21 = vector.extract_strided_slice %16 {offsets = [0, 0], sizes = [8, 8], strides = [1, 1]} : vector<8x32xbf16> to vector<8x8xbf16>
    %22 = vector.extract_strided_slice %16 {offsets = [0, 8], sizes = [8, 8], strides = [1, 1]} : vector<8x32xbf16> to vector<8x8xbf16>
    %23 = vector.extract_strided_slice %16 {offsets = [0, 16], sizes = [8, 8], strides = [1, 1]} : vector<8x32xbf16> to vector<8x8xbf16>
    %24 = vector.extract_strided_slice %16 {offsets = [0, 24], sizes = [8, 8], strides = [1, 1]} : vector<8x32xbf16> to vector<8x8xbf16>
    %25 = vector.shape_cast %21 : vector<8x8xbf16> to vector<1x8x8xbf16>
    %26 = vector.shape_cast %22 : vector<8x8xbf16> to vector<1x8x8xbf16>
    %27 = vector.shape_cast %23 : vector<8x8xbf16> to vector<1x8x8xbf16>
    %28 = vector.shape_cast %24 : vector<8x8xbf16> to vector<1x8x8xbf16>
    %29 = tpu.concatenate %25, %26, %27, %28 in 0 : vector<1x8x8xbf16>, vector<1x8x8xbf16>, vector<1x8x8xbf16>, vector<1x8x8xbf16> -> vector<4x8x8xbf16>
    %30 = vector.extract_strided_slice %18 {offsets = [0, 0], sizes = [8, 8], strides = [1, 1]} : vector<8x32xbf16> to vector<8x8xbf16>
    %31 = vector.extract_strided_slice %18 {offsets = [0, 8], sizes = [8, 8], strides = [1, 1]} : vector<8x32xbf16> to vector<8x8xbf16>
    %32 = vector.extract_strided_slice %18 {offsets = [0, 16], sizes = [8, 8], strides = [1, 1]} : vector<8x32xbf16> to vector<8x8xbf16>
    %33 = vector.extract_strided_slice %18 {offsets = [0, 24], sizes = [8, 8], strides = [1, 1]} : vector<8x32xbf16> to vector<8x8xbf16>
    %34 = vector.shape_cast %30 : vector<8x8xbf16> to vector<1x8x8xbf16>
    %35 = vector.shape_cast %31 : vector<8x8xbf16> to vector<1x8x8xbf16>
    %36 = vector.shape_cast %32 : vector<8x8xbf16> to vector<1x8x8xbf16>
    %37 = vector.shape_cast %33 : vector<8x8xbf16> to vector<1x8x8xbf16>
    %38 = tpu.concatenate %34, %35, %36, %37 in 0 : vector<1x8x8xbf16>, vector<1x8x8xbf16>, vector<1x8x8xbf16>, vector<1x8x8xbf16> -> vector<4x8x8xbf16>
    %39 = vector.extract_strided_slice %20 {offsets = [0, 0], sizes = [8, 8], strides = [1, 1]} : vector<8x32xbf16> to vector<8x8xbf16>
    %40 = vector.extract_strided_slice %20 {offsets = [0, 8], sizes = [8, 8], strides = [1, 1]} : vector<8x32xbf16> to vector<8x8xbf16>
    %41 = vector.extract_strided_slice %20 {offsets = [0, 16], sizes = [8, 8], strides = [1, 1]} : vector<8x32xbf16> to vector<8x8xbf16>
    %42 = vector.extract_strided_slice %20 {offsets = [0, 24], sizes = [8, 8], strides = [1, 1]} : vector<8x32xbf16> to vector<8x8xbf16>
    %43 = vector.shape_cast %39 : vector<8x8xbf16> to vector<1x8x8xbf16>
    %44 = vector.shape_cast %40 : vector<8x8xbf16> to vector<1x8x8xbf16>
    %45 = vector.shape_cast %41 : vector<8x8xbf16> to vector<1x8x8xbf16>
    %46 = vector.shape_cast %42 : vector<8x8xbf16> to vector<1x8x8xbf16>
    %47 = tpu.concatenate %43, %44, %45, %46 in 0 : vector<1x8x8xbf16>, vector<1x8x8xbf16>, vector<1x8x8xbf16>, vector<1x8x8xbf16> -> vector<4x8x8xbf16>
    "tpu.trace_start"() <{level = 10 : i32, message = "hqd,hkd->hqk"}> : () -> ()
    %cst_11 = arith.constant dense<0.000000e+00> : vector<4x8x8xf32>
    %48 = tpu.matmul %29, %38, %cst_11 {dimension_numbers = #tpu.dot_dimension_numbers<[2], [2], [1], [1], [0, 0, 0, 1, 1, 1], [0], [0]>} : vector<4x8x8xbf16>, vector<4x8x8xbf16>, vector<4x8x8xf32> -> vector<4x8x8xf32>
    "tpu.trace_stop"() : () -> ()
    %49 = vector.shape_cast %4 : vector<8x8xf32> to vector<1x8x8xf32>
    %50 = vector.broadcast %49 : vector<1x8x8xf32> to vector<4x8x8xf32>
    %51 = arith.addf %48, %50 : vector<4x8x8xf32>
    %cst_12 = arith.constant dense<0xFF800000> : vector<4x8xf32>
    %52 = vector.multi_reduction <maximumf>, %51, %cst_12 [2] : vector<4x8x8xf32> to vector<4x8xf32>
    %53 = vector.shape_cast %52 : vector<4x8xf32> to vector<4x8x1xf32>
    %54 = vector.broadcast %53 : vector<4x8x1xf32> to vector<4x8x8xf32>
    %55 = arith.subf %51, %54 : vector<4x8x8xf32>
    %56 = math.exp %55 : vector<4x8x8xf32>
    %cst_13 = arith.constant dense<0.000000e+00> : vector<4x8xf32>
    %57 = vector.multi_reduction <add>, %56, %cst_13 [2] : vector<4x8x8xf32> to vector<4x8xf32>
    %58 = vector.shape_cast %57 : vector<4x8xf32> to vector<4x8x1xf32>
    %59 = tpu.reciprocal %58 {approx = true} : vector<4x8x1xf32> -> vector<4x8x1xf32>
    %60 = vector.broadcast %59 : vector<4x8x1xf32> to vector<4x8x8xf32>
    %61 = arith.mulf %56, %60 : vector<4x8x8xf32>
    %62 = arith.truncf %61 : vector<4x8x8xf32> to vector<4x8x8xbf16>
    "tpu.trace_start"() <{level = 10 : i32, message = "hqk,hkd->hqd"}> : () -> ()
    %cst_14 = arith.constant dense<0.000000e+00> : vector<4x8x8xf32>
    %63 = tpu.matmul %62, %47, %cst_14 {dimension_numbers = #tpu.dot_dimension_numbers<[2], [1], [1], [2], [0, 0, 0, 1, 1, 2], [0], [0]>} : vector<4x8x8xbf16>, vector<4x8x8xbf16>, vector<4x8x8xf32> -> vector<4x8x8xf32>
    "tpu.trace_stop"() : () -> ()
    %64 = vector.extract_strided_slice %63 {offsets = [0, 0, 0], sizes = [1, 8, 8], strides = [1, 1, 1]} : vector<4x8x8xf32> to vector<1x8x8xf32>
    %65 = vector.shape_cast %64 : vector<1x8x8xf32> to vector<8x8xf32>
    %66 = vector.extract_strided_slice %63 {offsets = [1, 0, 0], sizes = [1, 8, 8], strides = [1, 1, 1]} : vector<4x8x8xf32> to vector<1x8x8xf32>
    %67 = vector.shape_cast %66 : vector<1x8x8xf32> to vector<8x8xf32>
    %68 = vector.extract_strided_slice %63 {offsets = [2, 0, 0], sizes = [1, 8, 8], strides = [1, 1, 1]} : vector<4x8x8xf32> to vector<1x8x8xf32>
    %69 = vector.shape_cast %68 : vector<1x8x8xf32> to vector<8x8xf32>
    %70 = vector.extract_strided_slice %63 {offsets = [3, 0, 0], sizes = [1, 8, 8], strides = [1, 1, 1]} : vector<4x8x8xf32> to vector<1x8x8xf32>
    %71 = vector.shape_cast %70 : vector<1x8x8xf32> to vector<8x8xf32>
    %72 = tpu.concatenate %65, %67, %69, %71 in 1 : vector<8x8xf32>, vector<8x8xf32>, vector<8x8xf32>, vector<8x8xf32> -> vector<8x32xf32>
    %73 = arith.truncf %72 : vector<8x32xf32> to vector<8x32xbf16>
    %c0_15 = arith.constant 0 : index
    %c0_16 = arith.constant 0 : index
    %c0_17 = arith.constant 0 : index
    %74 = vector.load %arg10[%c0_15, %c0_16, %c0_17] : memref<1x32x32xbf16, #tpu.memory_space<vmem>>, vector<1x32x32xbf16>
    %75 = vector.shape_cast %74 : vector<1x32x32xbf16> to vector<32x32xbf16>
    %cst_18 = arith.constant dense<0.000000e+00> : vector<8x32xf32>
    %76 = tpu.matmul %73, %75, %cst_18 {dimension_numbers = #tpu.dot_dimension_numbers<[1], [0], [0], [1], [0, 0, 1, 1], [], []>} : vector<8x32xbf16>, vector<32x32xbf16>, vector<8x32xf32> -> vector<8x32xf32>
    %c0_19 = arith.constant 0 : index
    %c0_20 = arith.constant 0 : index
    %c0_21 = arith.constant 0 : index
    %77 = vector.load %arg11[%c0_19, %c0_20, %c0_21] : memref<1x1x32xf32, #tpu.memory_space<vmem>>, vector<1x1x32xf32>
    %78 = vector.shape_cast %77 : vector<1x1x32xf32> to vector<1x32xf32>
    %79 = vector.broadcast %78 : vector<1x32xf32> to vector<8x32xf32>
    %80 = arith.addf %76, %79 : vector<8x32xf32>
    %81 = arith.addf %3, %80 : vector<8x32xf32>
    %c0_22 = arith.constant 0 : index
    %c0_23 = arith.constant 0 : index
    %c0_24 = arith.constant 0 : index
    %82 = vector.load %arg12[%c0_22, %c0_23, %c0_24] : memref<1x1x32xf32, #tpu.memory_space<vmem>>, vector<1x1x32xf32>
    %83 = vector.shape_cast %82 : vector<1x1x32xf32> to vector<1x32xf32>
    %c0_25 = arith.constant 0 : index
    %c0_26 = arith.constant 0 : index
    %c0_27 = arith.constant 0 : index
    %84 = vector.load %arg13[%c0_25, %c0_26, %c0_27] : memref<1x1x32xf32, #tpu.memory_space<vmem>>, vector<1x1x32xf32>
    %85 = vector.shape_cast %84 : vector<1x1x32xf32> to vector<1x32xf32>
    %cst_28 = arith.constant dense<0.000000e+00> : vector<8xf32>
    %86 = vector.multi_reduction <add>, %81, %cst_28 [1] : vector<8x32xf32> to vector<8xf32>
    %87 = vector.shape_cast %86 : vector<8xf32> to vector<8x1xf32>
    %cst_29 = arith.constant 3.200000e+01 : f32
    %88 = vector.broadcast %cst_29 : f32 to vector<8x1xf32>
    %89 = arith.divf %87, %88 : vector<8x1xf32>
    %90 = vector.broadcast %89 : vector<8x1xf32> to vector<8x32xf32>
    %91 = arith.subf %81, %90 : vector<8x32xf32>
    %92 = arith.mulf %91, %91 : vector<8x32xf32>
    %cst_30 = arith.constant dense<0.000000e+00> : vector<8xf32>
    %93 = vector.multi_reduction <add>, %92, %cst_30 [1] : vector<8x32xf32> to vector<8xf32>
    %94 = vector.shape_cast %93 : vector<8xf32> to vector<8x1xf32>
    %cst_31 = arith.constant 3.200000e+01 : f32
    %95 = vector.broadcast %cst_31 : f32 to vector<8x1xf32>
    %96 = arith.divf %94, %95 : vector<8x1xf32>
    %97 = vector.broadcast %89 : vector<8x1xf32> to vector<8x32xf32>
    %98 = arith.subf %81, %97 : vector<8x32xf32>
    %cst_32 = arith.constant 9.99999974E-6 : f32
    %99 = vector.broadcast %cst_32 : f32 to vector<8x1xf32>
    %100 = arith.addf %96, %99 : vector<8x1xf32>
    %101 = math.rsqrt %100 : vector<8x1xf32>
    %102 = vector.broadcast %101 : vector<8x1xf32> to vector<8x32xf32>
    %103 = arith.mulf %98, %102 : vector<8x32xf32>
    %104 = vector.broadcast %83 : vector<1x32xf32> to vector<8x32xf32>
    %105 = arith.mulf %103, %104 : vector<8x32xf32>
    %106 = vector.broadcast %85 : vector<1x32xf32> to vector<8x32xf32>
    %107 = arith.addf %105, %106 : vector<8x32xf32>
    %108 = arith.truncf %107 : vector<8x32xf32> to vector<8x32xbf16>
    %c0_33 = arith.constant 0 : index
    %c0_34 = arith.constant 0 : index
    %c0_35 = arith.constant 0 : index
    %109 = vector.load %arg14[%c0_33, %c0_34, %c0_35] : memref<1x32x64xbf16, #tpu.memory_space<vmem>>, vector<1x32x64xbf16>
    %110 = vector.shape_cast %109 : vector<1x32x64xbf16> to vector<32x64xbf16>
    %cst_36 = arith.constant dense<0.000000e+00> : vector<8x64xf32>
    %111 = tpu.matmul %108, %110, %cst_36 {dimension_numbers = #tpu.dot_dimension_numbers<[1], [0], [0], [1], [0, 0, 1, 1], [], []>} : vector<8x32xbf16>, vector<32x64xbf16>, vector<8x64xf32> -> vector<8x64xf32>
    %c0_37 = arith.constant 0 : index
    %c0_38 = arith.constant 0 : index
    %c0_39 = arith.constant 0 : index
    %112 = vector.load %arg15[%c0_37, %c0_38, %c0_39] : memref<1x1x64xf32, #tpu.memory_space<vmem>>, vector<1x1x64xf32>
    %113 = vector.shape_cast %112 : vector<1x1x64xf32> to vector<1x64xf32>
    %114 = vector.broadcast %113 : vector<1x64xf32> to vector<8x64xf32>
    %115 = arith.addf %111, %114 : vector<8x64xf32>
    %cst_40 = arith.constant 0.000000e+00 : f32
    %116 = vector.broadcast %cst_40 : f32 to vector<8x64xf32>
    %117 = arith.maximumf %115, %116 : vector<8x64xf32>
    %118 = arith.truncf %117 : vector<8x64xf32> to vector<8x64xbf16>
    %c0_41 = arith.constant 0 : index
    %c0_42 = arith.constant 0 : index
    %c0_43 = arith.constant 0 : index
    %119 = vector.load %arg16[%c0_41, %c0_42, %c0_43] : memref<1x64x32xbf16, #tpu.memory_space<vmem>>, vector<1x64x32xbf16>
    %120 = vector.shape_cast %119 : vector<1x64x32xbf16> to vector<64x32xbf16>
    %cst_44 = arith.constant dense<0.000000e+00> : vector<8x32xf32>
    %121 = tpu.matmul %118, %120, %cst_44 {dimension_numbers = #tpu.dot_dimension_numbers<[1], [0], [0], [1], [0, 0, 1, 1], [], []>} : vector<8x64xbf16>, vector<64x32xbf16>, vector<8x32xf32> -> vector<8x32xf32>
    %c0_45 = arith.constant 0 : index
    %c0_46 = arith.constant 0 : index
    %c0_47 = arith.constant 0 : index
    %122 = vector.load %arg17[%c0_45, %c0_46, %c0_47] : memref<1x1x32xf32, #tpu.memory_space<vmem>>, vector<1x1x32xf32>
    %123 = vector.shape_cast %122 : vector<1x1x32xf32> to vector<1x32xf32>
    %124 = vector.broadcast %123 : vector<1x32xf32> to vector<8x32xf32>
    %125 = arith.addf %121, %124 : vector<8x32xf32>
    %126 = arith.addf %107, %125 : vector<8x32xf32>
    %c0_48 = arith.constant 0 : index
    %c0_49 = arith.constant 0 : index
    %c0_50 = arith.constant 0 : index
    %127 = vector.load %arg18[%c0_48, %c0_49, %c0_50] : memref<1x1x32xf32, #tpu.memory_space<vmem>>, vector<1x1x32xf32>
    %128 = vector.shape_cast %127 : vector<1x1x32xf32> to vector<1x32xf32>
    %c0_51 = arith.constant 0 : index
    %c0_52 = arith.constant 0 : index
    %c0_53 = arith.constant 0 : index
    %129 = vector.load %arg19[%c0_51, %c0_52, %c0_53] : memref<1x1x32xf32, #tpu.memory_space<vmem>>, vector<1x1x32xf32>
    %130 = vector.shape_cast %129 : vector<1x1x32xf32> to vector<1x32xf32>
    %cst_54 = arith.constant dense<0.000000e+00> : vector<8xf32>
    %131 = vector.multi_reduction <add>, %126, %cst_54 [1] : vector<8x32xf32> to vector<8xf32>
    %132 = vector.shape_cast %131 : vector<8xf32> to vector<8x1xf32>
    %cst_55 = arith.constant 3.200000e+01 : f32
    %133 = vector.broadcast %cst_55 : f32 to vector<8x1xf32>
    %134 = arith.divf %132, %133 : vector<8x1xf32>
    %135 = vector.broadcast %134 : vector<8x1xf32> to vector<8x32xf32>
    %136 = arith.subf %126, %135 : vector<8x32xf32>
    %137 = arith.mulf %136, %136 : vector<8x32xf32>
    %cst_56 = arith.constant dense<0.000000e+00> : vector<8xf32>
    %138 = vector.multi_reduction <add>, %137, %cst_56 [1] : vector<8x32xf32> to vector<8xf32>
    %139 = vector.shape_cast %138 : vector<8xf32> to vector<8x1xf32>
    %cst_57 = arith.constant 3.200000e+01 : f32
    %140 = vector.broadcast %cst_57 : f32 to vector<8x1xf32>
    %141 = arith.divf %139, %140 : vector<8x1xf32>
    %142 = vector.broadcast %134 : vector<8x1xf32> to vector<8x32xf32>
    %143 = arith.subf %126, %142 : vector<8x32xf32>
    %cst_58 = arith.constant 9.99999974E-6 : f32
    %144 = vector.broadcast %cst_58 : f32 to vector<8x1xf32>
    %145 = arith.addf %141, %144 : vector<8x1xf32>
    %146 = math.rsqrt %145 : vector<8x1xf32>
    %147 = vector.broadcast %146 : vector<8x1xf32> to vector<8x32xf32>
    %148 = arith.mulf %143, %147 : vector<8x32xf32>
    %149 = vector.broadcast %128 : vector<1x32xf32> to vector<8x32xf32>
    %150 = arith.mulf %148, %149 : vector<8x32xf32>
    %151 = vector.broadcast %130 : vector<1x32xf32> to vector<8x32xf32>
    %152 = arith.addf %150, %151 : vector<8x32xf32>
    %c0_59 = arith.constant 0 : index
    %c0_60 = arith.constant 0 : index
    %153 = vector.load %arg23[%c0_59, %c0_60] : memref<8x32xf32, #tpu.memory_space<vmem>>, vector<8x32xf32>
    tpu.vector_store %arg23[%c0_59, %c0_60], %152 {strides = array<i32>} : memref<8x32xf32, #tpu.memory_space<vmem>>, vector<8x32xf32>,
    %c1_i32 = arith.constant 1 : i32
    %154 = arith.cmpi eq, %arg1, %c1_i32 : i32
    %155 = arith.extui %154 : i1 to i32
    %c0_i32_61 = arith.constant 0 : i32
    %156 = arith.cmpi ne, %155, %c0_i32_61 : i32
    scf.if %156 {
      %157 = arith.truncf %152 : vector<8x32xf32> to vector<8x32xbf16>
      %c0_62 = arith.constant 0 : index
      %c0_63 = arith.constant 0 : index
      %158 = vector.load %arg20[%c0_62, %c0_63] : memref<32x128xbf16, #tpu.memory_space<vmem>>, vector<32x128xbf16>
      %cst_64 = arith.constant dense<0.000000e+00> : vector<8x128xf32>
      %159 = tpu.matmul %157, %158, %cst_64 {dimension_numbers = #tpu.dot_dimension_numbers<[1], [0], [0], [1], [0, 0, 1, 1], [], []>} : vector<8x32xbf16>, vector<32x128xbf16>, vector<8x128xf32> -> vector<8x128xf32>
      %c0_65 = arith.constant 0 : index
      %c0_66 = arith.constant 0 : index
      %160 = vector.load %arg21[%c0_65, %c0_66] : memref<1x128xf32, #tpu.memory_space<vmem>>, vector<1x128xf32>
      %161 = vector.broadcast %160 : vector<1x128xf32> to vector<8x128xf32>
      %162 = arith.addf %159, %161 : vector<8x128xf32>
      %c0_67 = arith.constant 0 : index
      %c0_68 = arith.constant 0 : index
      %163 = vector.load %arg22[%c0_67, %c0_68] : memref<8x128xf32, #tpu.memory_space<vmem>>, vector<8x128xf32>
      tpu.vector_store %arg22[%c0_67, %c0_68], %162 {strides = array<i32>} : memref<8x128xf32, #tpu.memory_space<vmem>>, vector<8x128xf32>,
    } else {
    }
    return
  }
  func.func @transform_0(%arg0: i32, %arg1: i32) -> (i32, i32) {
    %c0_i32 = arith.constant 0 : i32
    %c0_i32_0 = arith.constant 0 : i32
    return %arg0, %c0_i32 : i32, i32
  }
  func.func @transform_1(%arg0: i32, %arg1: i32) -> (i32, i32) {
    %c0_i32 = arith.constant 0 : i32
    %c0_i32_0 = arith.constant 0 : i32
    %c0_i32_1 = arith.constant 0 : i32
    return %c0_i32, %c0_i32_0 : i32, i32
  }
  func.func @transform_2(%arg0: i32, %arg1: i32) -> (i32, i32, i32) {
    %c0_i32 = arith.constant 0 : i32
    %c0_i32_0 = arith.constant 0 : i32
    %c0_i32_1 = arith.constant 0 : i32
    return %arg0, %c0_i32, %c0_i32_0 : i32, i32, i32
  }
  func.func @transform_3(%arg0: i32, %arg1: i32) -> (i32, i32) {
    %c0_i32 = arith.constant 0 : i32
    %c0_i32_0 = arith.constant 0 : i32
    %c0_i32_1 = arith.constant 0 : i32
    return %c0_i32, %c0_i32_0 : i32, i32
  }
  func.func @transform_4(%arg0: i32, %arg1: i32) -> (i32, i32) {
    %c0_i32 = arith.constant 0 : i32
    %c0_i32_0 = arith.constant 0 : i32
    %c0_i32_1 = arith.constant 0 : i32
    return %c0_i32, %c0_i32_0 : i32, i32
  }
  func.func @transform_5(%arg0: i32, %arg1: i32) -> (i32, i32) {
    %c0_i32 = arith.constant 0 : i32
    %c0_i32_0 = arith.constant 0 : i32
    %c0_i32_1 = arith.constant 0 : i32
    return %c0_i32, %c0_i32_0 : i32, i32
  }
  func.func @transform_6(%arg0: i32, %arg1: i32) -> (i32, i32, i32) {
    %c0_i32 = arith.constant 0 : i32
    %c0_i32_0 = arith.constant 0 : i32
    %c0_i32_1 = arith.constant 0 : i32
    return %arg1, %c0_i32, %c0_i32_0 : i32, i32, i32
  }
  func.func @transform_7(%arg0: i32, %arg1: i32) -> (i32, i32, i32) {
    %c0_i32 = arith.constant 0 : i32
    %c0_i32_0 = arith.constant 0 : i32
    %c0_i32_1 = arith.constant 0 : i32
    return %arg1, %c0_i32, %c0_i32_0 : i32, i32, i32
  }
  func.func @transform_8(%arg0: i32, %arg1: i32) -> (i32, i32, i32) {
    %c0_i32 = arith.constant 0 : i32
    %c0_i32_0 = arith.constant 0 : i32
    %c0_i32_1 = arith.constant 0 : i32
    return %arg1, %c0_i32, %c0_i32_0 : i32, i32, i32
  }
  func.func @transform_9(%arg0: i32, %arg1: i32) -> (i32, i32, i32) {
    %c0_i32 = arith.constant 0 : i32
    %c0_i32_0 = arith.constant 0 : i32
    %c0_i32_1 = arith.constant 0 : i32
    return %arg1, %c0_i32, %c0_i32_0 : i32, i32, i32
  }
  func.func @transform_10(%arg0: i32, %arg1: i32) -> (i32, i32, i32) {
    %c0_i32 = arith.constant 0 : i32
    %c0_i32_0 = arith.constant 0 : i32
    %c0_i32_1 = arith.constant 0 : i32
    return %arg1, %c0_i32, %c0_i32_0 : i32, i32, i32
  }
  func.func @transform_11(%arg0: i32, %arg1: i32) -> (i32, i32, i32) {
    %c0_i32 = arith.constant 0 : i32
    %c0_i32_0 = arith.constant 0 : i32
    %c0_i32_1 = arith.constant 0 : i32
    return %arg1, %c0_i32, %c0_i32_0 : i32, i32, i32
  }
  func.func @transform_12(%arg0: i32, %arg1: i32) -> (i32, i32, i32) {
    %c0_i32 = arith.constant 0 : i32
    %c0_i32_0 = arith.constant 0 : i32
    %c0_i32_1 = arith.constant 0 : i32
    return %arg1, %c0_i32, %c0_i32_0 : i32, i32, i32
  }
  func.func @transform_13(%arg0: i32, %arg1: i32) -> (i32, i32, i32) {
    %c0_i32 = arith.constant 0 : i32
    %c0_i32_0 = arith.constant 0 : i32
    %c0_i32_1 = arith.constant 0 : i32
    return %arg1, %c0_i32, %c0_i32_0 : i32, i32, i32
  }
  func.func @transform_14(%arg0: i32, %arg1: i32) -> (i32, i32, i32) {
    %c0_i32 = arith.constant 0 : i32
    %c0_i32_0 = arith.constant 0 : i32
    %c0_i32_1 = arith.constant 0 : i32
    return %arg1, %c0_i32, %c0_i32_0 : i32, i32, i32
  }
  func.func @transform_15(%arg0: i32, %arg1: i32) -> (i32, i32, i32) {
    %c0_i32 = arith.constant 0 : i32
    %c0_i32_0 = arith.constant 0 : i32
    %c0_i32_1 = arith.constant 0 : i32
    return %arg1, %c0_i32, %c0_i32_0 : i32, i32, i32
  }
  func.func @transform_16(%arg0: i32, %arg1: i32) -> (i32, i32, i32) {
    %c0_i32 = arith.constant 0 : i32
    %c0_i32_0 = arith.constant 0 : i32
    %c0_i32_1 = arith.constant 0 : i32
    return %arg1, %c0_i32, %c0_i32_0 : i32, i32, i32
  }
  func.func @transform_17(%arg0: i32, %arg1: i32) -> (i32, i32, i32) {
    %c0_i32 = arith.constant 0 : i32
    %c0_i32_0 = arith.constant 0 : i32
    %c0_i32_1 = arith.constant 0 : i32
    return %arg1, %c0_i32, %c0_i32_0 : i32, i32, i32
  }
  func.func @transform_18(%arg0: i32, %arg1: i32) -> (i32, i32) {
    %c0_i32 = arith.constant 0 : i32
    %c0_i32_0 = arith.constant 0 : i32
    %c0_i32_1 = arith.constant 0 : i32
    return %c0_i32, %c0_i32_0 : i32, i32
  }
  func.func @transform_19(%arg0: i32, %arg1: i32) -> (i32, i32) {
    %c0_i32 = arith.constant 0 : i32
    %c0_i32_0 = arith.constant 0 : i32
    %c0_i32_1 = arith.constant 0 : i32
    return %c0_i32, %c0_i32_0 : i32, i32
  }
  func.func @transform_20(%arg0: i32, %arg1: i32) -> (i32, i32) {
    %c0_i32 = arith.constant 0 : i32
    %c0_i32_0 = arith.constant 0 : i32
    return %arg0, %c0_i32 : i32, i32
  }
}

</mosaic_0001>

<llo_original>
// kernel: tpu_custom_call.1
$region0: #{tpu_custom_call.1}
  #allocation0 [shape = 'u32[]', space=smem, size = 0x4, offset = 0x4, fixed_abs, tag = 'smem constant byte address 0x4 - core index']
  #allocation1 [shape = 'u32[72,128]{1,0:T(1,128)}', space=vmem, size = 0x9000, scoped, tag = 'internal scratch']
  #allocation2 [shape = 'f32[8,32]{1,0:T(8,128)}', space=vmem, size = 0x1000, scoped, tag = 'scratch operand']
  #allocation3 [shape = 'f32[8,8]{1,0:T(8,128)}', space=vmem, size = 0x1000, scoped, tag = 'scratch operand']
  %s0 = inlined_call_operand.vmem [shape: f32[16,4], index: 0, kind: input, shape index: {}]
  %s1 = inlined_call_operand.hbm [shape: f32[8,8], index: 1, kind: input, shape index: {}]
  %s2 = inlined_call_operand.hbm [shape: f32[2,1,8], index: 2, kind: input, shape index: {}]
  %s3 = inlined_call_operand.hbm [shape: f32[8,32], index: 3, kind: input, shape index: {}]
  %s4 = inlined_call_operand.hbm [shape: bf16[4,32], index: 4, kind: input, shape index: {}]
  %s5 = inlined_call_operand.vmem [shape: f32[1,32], index: 5, kind: input, shape index: {}]
  %s6 = inlined_call_operand.vmem [shape: bf16[2,32,96], index: 6, kind: input, shape index: {}]
  %s7 = inlined_call_operand.hbm [shape: f32[2,1,96], index: 7, kind: input, shape index: {}]
  %s8 = inlined_call_operand.vmem [shape: bf16[2,32,32], index: 8, kind: input, shape index: {}]
  %s9 = inlined_call_operand.hbm [shape: f32[2,1,32], index: 9, kind: input, shape index: {}]
  %s10 = inlined_call_operand.hbm [shape: f32[2,1,32], index: 10, kind: input, shape index: {}]
  %s11 = inlined_call_operand.hbm [shape: f32[2,1,32], index: 11, kind: input, shape index: {}]
  %s12 = inlined_call_operand.vmem [shape: bf16[2,32,64], index: 12, kind: input, shape index: {}]
  %s13 = inlined_call_operand.hbm [shape: f32[2,1,64], index: 13, kind: input, shape index: {}]
  %s14 = inlined_call_operand.vmem [shape: bf16[2,64,32], index: 14, kind: input, shape index: {}]
  %s15 = inlined_call_operand.hbm [shape: f32[2,1,32], index: 15, kind: input, shape index: {}]
  %s16 = inlined_call_operand.vmem [shape: f32[2,1,32], index: 16, kind: input, shape index: {}]
  %s17 = inlined_call_operand.hbm [shape: f32[2,1,32], index: 17, kind: input, shape index: {}]
  %s18 = inlined_call_operand.hbm [shape: bf16[32,128], index: 18, kind: input, shape index: {}]
  %s19 = inlined_call_operand.vmem [shape: f32[1,128], index: 19, kind: input, shape index: {}]
  %s20 = inlined_call_operand.hbm [shape: f32[16,128], index: 20, kind: output, shape index: {}]
  %s21 = sld [smem:[#allocation0]]
  $region169: #{tpu_custom_call.1} parent=0
    _
  %s23 = ssub.s32 1, %s21
  %s24 = scalar_select 0, %s23, %s21
  $region1: #{tpu_custom_call.1} parent=0
    #allocation4 [shape = 'u8[4096]{0}', space=vmem, size = 0x1000, scoped, tag = 'input window, operand 1, single buffered']
    #allocation5 [shape = 's32[2]{0}', space=sflag, size = 0x8, scoped, tag = 'scoped memory for tpu_custom_call.1']
    #allocation6 [shape = 's32[2]{0}', space=sflag, size = 0x8, scoped, tag = 'scoped memory for tpu_custom_call.1']
    #allocation7 [shape = 'u8[1024]{0}', space=vmem, size = 0x400, scoped, tag = 'input window, operand 2']
    #allocation8 [shape = 's32[2]{0}', space=sflag, size = 0x8, scoped, tag = 'scoped memory for tpu_custom_call.1']
    #allocation9 [shape = 'u8[4096]{0}', space=vmem, size = 0x1000, scoped, tag = 'input window, operand 3, single buffered']
    #allocation10 [shape = 'u8[1024]{0}', space=vmem, size = 0x400, scoped, tag = 'input window, operand 4, single buffered']
    #allocation11 [shape = 's32[1]{0}', space=sflag, size = 0x4, scoped, tag = 'scoped memory for tpu_custom_call.1']
    #allocation12 [shape = 'u8[1024]{0}', space=vmem, size = 0x400, scoped, tag = 'input window, operand 7']
    #allocation13 [shape = 'u8[1024]{0}', space=vmem, size = 0x400, scoped, tag = 'input window, operand 9']
    #allocation14 [shape = 'u8[1024]{0}', space=vmem, size = 0x400, scoped, tag = 'input window, operand 10']
    #allocation15 [shape = 'u8[1024]{0}', space=vmem, size = 0x400, scoped, tag = 'input window, operand 11']
    #allocation16 [shape = 'u8[1024]{0}', space=vmem, size = 0x400, scoped, tag = 'input window, operand 13']
    #allocation17 [shape = 'u8[1024]{0}', space=vmem, size = 0x400, scoped, tag = 'input window, operand 15']
    #allocation18 [shape = 'u8[1024]{0}', space=vmem, size = 0x400, scoped, tag = 'input window, operand 17']
    #allocation19 [shape = 'u8[8192]{0}', space=vmem, size = 0x2000, scoped, tag = 'input window, operand 18, single buffered']
    #allocation20 [shape = 'u8[8192]{0}', space=vmem, size = 0x2000, scoped, tag = 'output window, operand 0']
    %25 = vsyncpa [#allocation5], 0
    %26 = vsyncpa [#allocation8], 0
    %s27 = scalar_lea.sflag [#allocation8], 1
    %28 = vsyncpa %s27, 0
    %29 = vsyncpa [#allocation11], 0
    %30 = vsyncpa [#allocation6], 0
    %s31 = scalar_lea.sflag [#allocation6], 1
    %32 = vsyncpa %s31, 0
    loop: start=0, step=1, limit=6
    $region2: #{tpu_custom_call.1} parent=1 // loop_pre_header
      _
    $region3: #{tpu_custom_call.1} parent=1 // loop_header
      %s34 = sphi 0, %s38
      %p35 = scmp.ge.s32.totalorder %s34, 6
      %s41 = sphi 0, %s53
      %s42 = sphi 0, %s49
      %s43 = sphi 0, %s41
      %s44 = sphi 0, %s42
      %s45 = sphi 0, %s43
      %s46 = sphi 0, %s44
      %s56 = sphi 0, %s58
      %s59 = sphi 0, %s56
      %s60 = sphi 0, %s59
      %s76 = sphi 0, %s60
      %s80 = sphi 0, %s80
      %s82 = sphi 0, %s80
      %s83 = sphi 0, %s82
      %s97 = sphi 0, %s83
      %s103 = sphi 0, %s105
      %s106 = sphi 0, %s103
      %s107 = sphi 0, %s106
      %s123 = sphi 0, %s107
      %s127 = sphi 0, %s127
      %s129 = sphi 0, %s127
      %s130 = sphi 0, %s129
      %s144 = sphi 0, %s130
      %s148 = sphi 0, %s148
      %s150 = sphi 0, %s148
      %s151 = sphi 0, %s150
      %s165 = sphi 0, %s151
      %s169 = sphi 0, %s169
      %s171 = sphi 0, %s169
      %s172 = sphi 0, %s171
      %s186 = sphi 0, %s172
      %s192 = sphi 0, %s194
      %s195 = sphi 0, %s192
      %s196 = sphi 0, %s195
      %s212 = sphi 0, %s196
      %s218 = sphi 0, %s220
      %s221 = sphi 0, %s218
      %s222 = sphi 0, %s221
      %s238 = sphi 0, %s222
      %s244 = sphi 0, %s246
      %s247 = sphi 0, %s244
      %s248 = sphi 0, %s247
      %s264 = sphi 0, %s248
      %s270 = sphi 0, %s272
      %s273 = sphi 0, %s270
      %s274 = sphi 0, %s273
      %s290 = sphi 0, %s274
      %s296 = sphi 0, %s298
      %s299 = sphi 0, %s296
      %s300 = sphi 0, %s299
      %s316 = sphi 0, %s300
      %s322 = sphi 0, %s324
      %s325 = sphi 0, %s322
      %s326 = sphi 0, %s325
      %s342 = sphi 0, %s326
      %s348 = sphi 0, %s350
      %s351 = sphi 0, %s348
      %s352 = sphi 0, %s351
      %s368 = sphi 0, %s352
      %s374 = sphi 0, %s376
      %s377 = sphi 0, %s374
      %s378 = sphi 0, %s377
      %s394 = sphi 0, %s378
      %s400 = sphi 0, %s402
      %s403 = sphi 0, %s400
      %s404 = sphi 0, %s403
      %s420 = sphi 0, %s404
      %s426 = sphi 0, %s428
      %s429 = sphi 0, %s426
      %s430 = sphi 0, %s429
      %s446 = sphi 0, %s430
      %s452 = sphi 0, %s454
      %s455 = sphi 0, %s452
      %s456 = sphi 0, %s455
      %s472 = sphi 0, %s456
      %s478 = sphi 0, %s480
      %s481 = sphi 0, %s478
      %s482 = sphi 0, %s481
      %s498 = sphi 0, %s482
      %s502 = sphi 0, %s502
      %s504 = sphi 0, %s502
      %s505 = sphi 0, %s504
      %s519 = sphi 0, %s505
      %s523 = sphi 0, %s523
      %s525 = sphi 0, %s523
      %s526 = sphi 0, %s525
      %s540 = sphi 0, %s526
      %s546 = sphi 0, %s548
      %s549 = sphi 0, %s546
      %s550 = sphi 0, %s549
      %s566 = sphi 0, %s550
    $region4: #{tpu_custom_call.1} parent=1 // loop_header_branch
      %37 = sbr.rel (%p35) target = $region8
    $region5: #{tpu_custom_call.1} parent=1 // loop_body
      %s39 = ssub.s32 %s34, 1
      %s40 = ssub.s32 %s34, 2
      %s47 = sadd.s32 1, %s42
      %p48 = scmp.ge.s32.totalorder %s47, 2
      %s49 = scalar_select %p48, 0, %s47
      %s50 = sadd.s32 1, %s41
      %s51 = scalar_select %p48, %s50, %s41
      %p52 = scmp.ge.s32.totalorder %s51, 2
      %s53 = scalar_select %p52, 0, %s51
      %s54 = ssub.s32 %s41, %s53
      %p55 = scmp.eq.s32.totalorder %s54, 0
      %s57 = sadd.s32 %s56, 1
      %s58 = scalar_select %p55, %s56, %s57
      %p61 = pneg %p55
      %p62 = scmp.eq.s32.totalorder %s34, 3
      %p63 = por %p61, %p62
      %p64 = scmp.ne.s32.totalorder %s56, %s59
      %p65 = scmp.eq.s32.totalorder %s34, 0
      %p66 = por %p64, %p65
      %p67 = scmp.ne.s32.totalorder %s56, %s59
      %p68 = scmp.eq.s32.totalorder %s39, 3
      %p69 = por %p67, %p68
      %p70 = scmp.ne.s32.totalorder %s59, %s60
      %p71 = scmp.eq.s32.totalorder %s39, 0
      %p72 = por %p70, %p71
      %p73 = scmp.ne.s32.totalorder %s59, %s60
      %p74 = scmp.eq.s32.totalorder %s40, 3
      %p75 = por %p73, %p74
      %p77 = scmp.ne.s32.totalorder %s60, %s76
      %p78 = scmp.eq.s32.totalorder %s40, 0
      %p79 = por %p77, %p78
      %s81 = sadd.s32 %s80, 1
      %p84 = scmp.eq.s32.totalorder %s34, 3
      %p85 = scmp.ne.s32.totalorder %s80, %s82
      %p86 = scmp.eq.s32.totalorder %s34, 0
      %p87 = por %p85, %p86
      %p88 = scmp.ne.s32.totalorder %s80, %s82
      %p89 = scmp.eq.s32.totalorder %s39, 3
      %p90 = por %p88, %p89
      %p91 = scmp.ne.s32.totalorder %s82, %s83
      %p92 = scmp.eq.s32.totalorder %s39, 0
      %p93 = por %p91, %p92
      %p94 = scmp.ne.s32.totalorder %s82, %s83
      %p95 = scmp.eq.s32.totalorder %s40, 3
      %p96 = por %p94, %p95
      %p98 = scmp.ne.s32.totalorder %s83, %s97
      %p99 = scmp.eq.s32.totalorder %s40, 0
      %p100 = por %p98, %p99
      %s101 = ssub.s32 %s41, %s53
      %p102 = scmp.eq.s32.totalorder %s101, 0
      %s104 = sadd.s32 %s103, 1
      %s105 = scalar_select %p102, %s103, %s104
      %p108 = pneg %p102
      %p109 = scmp.eq.s32.totalorder %s34, 3
      %p110 = por %p108, %p109
      %p111 = scmp.ne.s32.totalorder %s103, %s106
      %p112 = scmp.eq.s32.totalorder %s34, 0
      %p113 = por %p111, %p112
      %p114 = scmp.ne.s32.totalorder %s103, %s106
      %p115 = scmp.eq.s32.totalorder %s39, 3
      %p116 = por %p114, %p115
      %p117 = scmp.ne.s32.totalorder %s106, %s107
      %p118 = scmp.eq.s32.totalorder %s39, 0
      %p119 = por %p117, %p118
      %p120 = scmp.ne.s32.totalorder %s106, %s107
      %p121 = scmp.eq.s32.totalorder %s40, 3
      %p122 = por %p120, %p121
      %p124 = scmp.ne.s32.totalorder %s107, %s123
      %p125 = scmp.eq.s32.totalorder %s40, 0
      %p126 = por %p124, %p125
      %s128 = sadd.s32 %s127, 1
      %p131 = scmp.eq.s32.totalorder %s34, 3
      %p132 = scmp.ne.s32.totalorder %s127, %s129
      %p133 = scmp.eq.s32.totalorder %s34, 0
      %p134 = por %p132, %p133
      %p135 = scmp.ne.s32.totalorder %s127, %s129
      %p136 = scmp.eq.s32.totalorder %s39, 3
      %p137 = por %p135, %p136
      %p138 = scmp.ne.s32.totalorder %s129, %s130
      %p139 = scmp.eq.s32.totalorder %s39, 0
      %p140 = por %p138, %p139
      %p141 = scmp.ne.s32.totalorder %s129, %s130
      %p142 = scmp.eq.s32.totalorder %s40, 3
      %p143 = por %p141, %p142
      %p145 = scmp.ne.s32.totalorder %s130, %s144
      %p146 = scmp.eq.s32.totalorder %s40, 0
      %p147 = por %p145, %p146
      %s149 = sadd.s32 %s148, 1
      %p152 = scmp.eq.s32.totalorder %s34, 3
      %p153 = scmp.ne.s32.totalorder %s148, %s150
      %p154 = scmp.eq.s32.totalorder %s34, 0
      %p155 = por %p153, %p154
      %p156 = scmp.ne.s32.totalorder %s148, %s150
      %p157 = scmp.eq.s32.totalorder %s39, 3
      %p158 = por %p156, %p157
      %p159 = scmp.ne.s32.totalorder %s150, %s151
      %p160 = scmp.eq.s32.totalorder %s39, 0
      %p161 = por %p159, %p160
      %p162 = scmp.ne.s32.totalorder %s150, %s151
      %p163 = scmp.eq.s32.totalorder %s40, 3
      %p164 = por %p162, %p163
      %p166 = scmp.ne.s32.totalorder %s151, %s165
      %p167 = scmp.eq.s32.totalorder %s40, 0
      %p168 = por %p166, %p167
      %s170 = sadd.s32 %s169, 1
      %p173 = scmp.eq.s32.totalorder %s34, 3
      %p174 = scmp.ne.s32.totalorder %s169, %s171
      %p175 = scmp.eq.s32.totalorder %s34, 0
      %p176 = por %p174, %p175
      %p177 = scmp.ne.s32.totalorder %s169, %s171
      %p178 = scmp.eq.s32.totalorder %s39, 3
      %p179 = por %p177, %p178
      %p180 = scmp.ne.s32.totalorder %s171, %s172
      %p181 = scmp.eq.s32.totalorder %s39, 0
      %p182 = por %p180, %p181
      %p183 = scmp.ne.s32.totalorder %s171, %s172
      %p184 = scmp.eq.s32.totalorder %s40, 3
      %p185 = por %p183, %p184
      %p187 = scmp.ne.s32.totalorder %s172, %s186
      %p188 = scmp.eq.s32.totalorder %s40, 0
      %p189 = por %p187, %p188
      %s190 = ssub.s32 %s42, %s49
      %p191 = scmp.eq.s32.totalorder %s190, 0
      %s193 = sadd.s32 %s192, 1
      %s194 = scalar_select %p191, %s192, %s193
      %p197 = pneg %p191
      %p198 = scmp.eq.s32.totalorder %s34, 3
      %p199 = por %p197, %p198
      %p200 = scmp.ne.s32.totalorder %s192, %s195
      %p201 = scmp.eq.s32.totalorder %s34, 0
      %p202 = por %p200, %p201
      %p203 = scmp.ne.s32.totalorder %s192, %s195
      %p204 = scmp.eq.s32.totalorder %s39, 3
      %p205 = por %p203, %p204
      %p206 = scmp.ne.s32.totalorder %s195, %s196
      %p207 = scmp.eq.s32.totalorder %s39, 0
      %p208 = por %p206, %p207
      %p209 = scmp.ne.s32.totalorder %s195, %s196
      %p210 = scmp.eq.s32.totalorder %s40, 3
      %p211 = por %p209, %p210
      %p213 = scmp.ne.s32.totalorder %s196, %s212
      %p214 = scmp.eq.s32.totalorder %s40, 0
      %p215 = por %p213, %p214
      %s216 = ssub.s32 %s42, %s49
      %p217 = scmp.eq.s32.totalorder %s216, 0
      %s219 = sadd.s32 %s218, 1
      %s220 = scalar_select %p217, %s218, %s219
      %p223 = pneg %p217
      %p224 = scmp.eq.s32.totalorder %s34, 3
      %p225 = por %p223, %p224
      %p226 = scmp.ne.s32.totalorder %s218, %s221
      %p227 = scmp.eq.s32.totalorder %s34, 0
      %p228 = por %p226, %p227
      %p229 = scmp.ne.s32.totalorder %s218, %s221
      %p230 = scmp.eq.s32.totalorder %s39, 3
      %p231 = por %p229, %p230
      %p232 = scmp.ne.s32.totalorder %s221, %s222
      %p233 = scmp.eq.s32.totalorder %s39, 0
      %p234 = por %p232, %p233
      %p235 = scmp.ne.s32.totalorder %s221, %s222
      %p236 = scmp.eq.s32.totalorder %s40, 3
      %p237 = por %p235, %p236
      %p239 = scmp.ne.s32.totalorder %s222, %s238
      %p240 = scmp.eq.s32.totalorder %s40, 0
      %p241 = por %p239, %p240
      %s242 = ssub.s32 %s42, %s49
      %p243 = scmp.eq.s32.totalorder %s242, 0
      %s245 = sadd.s32 %s244, 1
      %s246 = scalar_select %p243, %s244, %s245
      %p249 = pneg %p243
      %p250 = scmp.eq.s32.totalorder %s34, 3
      %p251 = por %p249, %p250
      %p252 = scmp.ne.s32.totalorder %s244, %s247
      %p253 = scmp.eq.s32.totalorder %s34, 0
      %p254 = por %p252, %p253
      %p255 = scmp.ne.s32.totalorder %s244, %s247
      %p256 = scmp.eq.s32.totalorder %s39, 3
      %p257 = por %p255, %p256
      %p258 = scmp.ne.s32.totalorder %s247, %s248
      %p259 = scmp.eq.s32.totalorder %s39, 0
      %p260 = por %p258, %p259
      %p261 = scmp.ne.s32.totalorder %s247, %s248
      %p262 = scmp.eq.s32.totalorder %s40, 3
      %p263 = por %p261, %p262
      %p265 = scmp.ne.s32.totalorder %s248, %s264
      %p266 = scmp.eq.s32.totalorder %s40, 0
      %p267 = por %p265, %p266
      %s268 = ssub.s32 %s42, %s49
      %p269 = scmp.eq.s32.totalorder %s268, 0
      %s271 = sadd.s32 %s270, 1
      %s272 = scalar_select %p269, %s270, %s271
      %p275 = pneg %p269
      %p276 = scmp.eq.s32.totalorder %s34, 3
      %p277 = por %p275, %p276
      %p278 = scmp.ne.s32.totalorder %s270, %s273
      %p279 = scmp.eq.s32.totalorder %s34, 0
      %p280 = por %p278, %p279
      %p281 = scmp.ne.s32.totalorder %s270, %s273
      %p282 = scmp.eq.s32.totalorder %s39, 3
      %p283 = por %p281, %p282
      %p284 = scmp.ne.s32.totalorder %s273, %s274
      %p285 = scmp.eq.s32.totalorder %s39, 0
      %p286 = por %p284, %p285
      %p287 = scmp.ne.s32.totalorder %s273, %s274
      %p288 = scmp.eq.s32.totalorder %s40, 3
      %p289 = por %p287, %p288
      %p291 = scmp.ne.s32.totalorder %s274, %s290
      %p292 = scmp.eq.s32.totalorder %s40, 0
      %p293 = por %p291, %p292
      %s294 = ssub.s32 %s42, %s49
      %p295 = scmp.eq.s32.totalorder %s294, 0
      %s297 = sadd.s32 %s296, 1
      %s298 = scalar_select %p295, %s296, %s297
      %p301 = pneg %p295
      %p302 = scmp.eq.s32.totalorder %s34, 3
      %p303 = por %p301, %p302
      %p304 = scmp.ne.s32.totalorder %s296, %s299
      %p305 = scmp.eq.s32.totalorder %s34, 0
      %p306 = por %p304, %p305
      %p307 = scmp.ne.s32.totalorder %s296, %s299
      %p308 = scmp.eq.s32.totalorder %s39, 3
      %p309 = por %p307, %p308
      %p310 = scmp.ne.s32.totalorder %s299, %s300
      %p311 = scmp.eq.s32.totalorder %s39, 0
      %p312 = por %p310, %p311
      %p313 = scmp.ne.s32.totalorder %s299, %s300
      %p314 = scmp.eq.s32.totalorder %s40, 3
      %p315 = por %p313, %p314
      %p317 = scmp.ne.s32.totalorder %s300, %s316
      %p318 = scmp.eq.s32.totalorder %s40, 0
      %p319 = por %p317, %p318
      %s320 = ssub.s32 %s42, %s49
      %p321 = scmp.eq.s32.totalorder %s320, 0
      %s323 = sadd.s32 %s322, 1
      %s324 = scalar_select %p321, %s322, %s323
      %p327 = pneg %p321
      %p328 = scmp.eq.s32.totalorder %s34, 3
      %p329 = por %p327, %p328
      %p330 = scmp.ne.s32.totalorder %s322, %s325
      %p331 = scmp.eq.s32.totalorder %s34, 0
      %p332 = por %p330, %p331
      %p333 = scmp.ne.s32.totalorder %s322, %s325
      %p334 = scmp.eq.s32.totalorder %s39, 3
      %p335 = por %p333, %p334
      %p336 = scmp.ne.s32.totalorder %s325, %s326
      %p337 = scmp.eq.s32.totalorder %s39, 0
      %p338 = por %p336, %p337
      %p339 = scmp.ne.s32.totalorder %s325, %s326
      %p340 = scmp.eq.s32.totalorder %s40, 3
      %p341 = por %p339, %p340
      %p343 = scmp.ne.s32.totalorder %s326, %s342
      %p344 = scmp.eq.s32.totalorder %s40, 0
      %p345 = por %p343, %p344
      %s346 = ssub.s32 %s42, %s49
      %p347 = scmp.eq.s32.totalorder %s346, 0
      %s349 = sadd.s32 %s348, 1
      %s350 = scalar_select %p347, %s348, %s349
      %p353 = pneg %p347
      %p354 = scmp.eq.s32.totalorder %s34, 3
      %p355 = por %p353, %p354
      %p356 = scmp.ne.s32.totalorder %s348, %s351
      %p357 = scmp.eq.s32.totalorder %s34, 0
      %p358 = por %p356, %p357
      %p359 = scmp.ne.s32.totalorder %s348, %s351
      %p360 = scmp.eq.s32.totalorder %s39, 3
      %p361 = por %p359, %p360
      %p362 = scmp.ne.s32.totalorder %s351, %s352
      %p363 = scmp.eq.s32.totalorder %s39, 0
      %p364 = por %p362, %p363
      %p365 = scmp.ne.s32.totalorder %s351, %s352
      %p366 = scmp.eq.s32.totalorder %s40, 3
      %p367 = por %p365, %p366
      %p369 = scmp.ne.s32.totalorder %s352, %s368
      %p370 = scmp.eq.s32.totalorder %s40, 0
      %p371 = por %p369, %p370
      %s372 = ssub.s32 %s42, %s49
      %p373 = scmp.eq.s32.totalorder %s372, 0
      %s375 = sadd.s32 %s374, 1
      %s376 = scalar_select %p373, %s374, %s375
      %p379 = pneg %p373
      %p380 = scmp.eq.s32.totalorder %s34, 3
      %p381 = por %p379, %p380
      %p382 = scmp.ne.s32.totalorder %s374, %s377
      %p383 = scmp.eq.s32.totalorder %s34, 0
      %p384 = por %p382, %p383
      %p385 = scmp.ne.s32.totalorder %s374, %s377
      %p386 = scmp.eq.s32.totalorder %s39, 3
      %p387 = por %p385, %p386
      %p388 = scmp.ne.s32.totalorder %s377, %s378
      %p389 = scmp.eq.s32.totalorder %s39, 0
      %p390 = por %p388, %p389
      %p391 = scmp.ne.s32.totalorder %s377, %s378
      %p392 = scmp.eq.s32.totalorder %s40, 3
      %p393 = por %p391, %p392
      %p395 = scmp.ne.s32.totalorder %s378, %s394
      %p396 = scmp.eq.s32.totalorder %s40, 0
      %p397 = por %p395, %p396
      %s398 = ssub.s32 %s42, %s49
      %p399 = scmp.eq.s32.totalorder %s398, 0
      %s401 = sadd.s32 %s400, 1
      %s402 = scalar_select %p399, %s400, %s401
      %p405 = pneg %p399
      %p406 = scmp.eq.s32.totalorder %s34, 3
      %p407 = por %p405, %p406
      %p408 = scmp.ne.s32.totalorder %s400, %s403
      %p409 = scmp.eq.s32.totalorder %s34, 0
      %p410 = por %p408, %p409
      %p411 = scmp.ne.s32.totalorder %s400, %s403
      %p412 = scmp.eq.s32.totalorder %s39, 3
      %p413 = por %p411, %p412
      %p414 = scmp.ne.s32.totalorder %s403, %s404
      %p415 = scmp.eq.s32.totalorder %s39, 0
      %p416 = por %p414, %p415
      %p417 = scmp.ne.s32.totalorder %s403, %s404
      %p418 = scmp.eq.s32.totalorder %s40, 3
      %p419 = por %p417, %p418
      %p421 = scmp.ne.s32.totalorder %s404, %s420
      %p422 = scmp.eq.s32.totalorder %s40, 0
      %p423 = por %p421, %p422
      %s424 = ssub.s32 %s42, %s49
      %p425 = scmp.eq.s32.totalorder %s424, 0
      %s427 = sadd.s32 %s426, 1
      %s428 = scalar_select %p425, %s426, %s427
      %p431 = pneg %p425
      %p432 = scmp.eq.s32.totalorder %s34, 3
      %p433 = por %p431, %p432
      %p434 = scmp.ne.s32.totalorder %s426, %s429
      %p435 = scmp.eq.s32.totalorder %s34, 0
      %p436 = por %p434, %p435
      %p437 = scmp.ne.s32.totalorder %s426, %s429
      %p438 = scmp.eq.s32.totalorder %s39, 3
      %p439 = por %p437, %p438
      %p440 = scmp.ne.s32.totalorder %s429, %s430
      %p441 = scmp.eq.s32.totalorder %s39, 0
      %p442 = por %p440, %p441
      %p443 = scmp.ne.s32.totalorder %s429, %s430
      %p444 = scmp.eq.s32.totalorder %s40, 3
      %p445 = por %p443, %p444
      %p447 = scmp.ne.s32.totalorder %s430, %s446
      %p448 = scmp.eq.s32.totalorder %s40, 0
      %p449 = por %p447, %p448
      %s450 = ssub.s32 %s42, %s49
      %p451 = scmp.eq.s32.totalorder %s450, 0
      %s453 = sadd.s32 %s452, 1
      %s454 = scalar_select %p451, %s452, %s453
      %p457 = pneg %p451
      %p458 = scmp.eq.s32.totalorder %s34, 3
      %p459 = por %p457, %p458
      %p460 = scmp.ne.s32.totalorder %s452, %s455
      %p461 = scmp.eq.s32.totalorder %s34, 0
      %p462 = por %p460, %p461
      %p463 = scmp.ne.s32.totalorder %s452, %s455
      %p464 = scmp.eq.s32.totalorder %s39, 3
      %p465 = por %p463, %p464
      %p466 = scmp.ne.s32.totalorder %s455, %s456
      %p467 = scmp.eq.s32.totalorder %s39, 0
      %p468 = por %p466, %p467
      %p469 = scmp.ne.s32.totalorder %s455, %s456
      %p470 = scmp.eq.s32.totalorder %s40, 3
      %p471 = por %p469, %p470
      %p473 = scmp.ne.s32.totalorder %s456, %s472
      %p474 = scmp.eq.s32.totalorder %s40, 0
      %p475 = por %p473, %p474
      %s476 = ssub.s32 %s42, %s49
      %p477 = scmp.eq.s32.totalorder %s476, 0
      %s479 = sadd.s32 %s478, 1
      %s480 = scalar_select %p477, %s478, %s479
      %p483 = pneg %p477
      %p484 = scmp.eq.s32.totalorder %s34, 3
      %p485 = por %p483, %p484
      %p486 = scmp.ne.s32.totalorder %s478, %s481
      %p487 = scmp.eq.s32.totalorder %s34, 0
      %p488 = por %p486, %p487
      %p489 = scmp.ne.s32.totalorder %s478, %s481
      %p490 = scmp.eq.s32.totalorder %s39, 3
      %p491 = por %p489, %p490
      %p492 = scmp.ne.s32.totalorder %s481, %s482
      %p493 = scmp.eq.s32.totalorder %s39, 0
      %p494 = por %p492, %p493
      %p495 = scmp.ne.s32.totalorder %s481, %s482
      %p496 = scmp.eq.s32.totalorder %s40, 3
      %p497 = por %p495, %p496
      %p499 = scmp.ne.s32.totalorder %s482, %s498
      %p500 = scmp.eq.s32.totalorder %s40, 0
      %p501 = por %p499, %p500
      %s503 = sadd.s32 %s502, 1
      %p506 = scmp.eq.s32.totalorder %s34, 3
      %p507 = scmp.ne.s32.totalorder %s502, %s504
      %p508 = scmp.eq.s32.totalorder %s34, 0
      %p509 = por %p507, %p508
      %p510 = scmp.ne.s32.totalorder %s502, %s504
      %p511 = scmp.eq.s32.totalorder %s39, 3
      %p512 = por %p510, %p511
      %p513 = scmp.ne.s32.totalorder %s504, %s505
      %p514 = scmp.eq.s32.totalorder %s39, 0
      %p515 = por %p513, %p514
      %p516 = scmp.ne.s32.totalorder %s504, %s505
      %p517 = scmp.eq.s32.totalorder %s40, 3
      %p518 = por %p516, %p517
      %p520 = scmp.ne.s32.totalorder %s505, %s519
      %p521 = scmp.eq.s32.totalorder %s40, 0
      %p522 = por %p520, %p521
      %s524 = sadd.s32 %s523, 1
      %p527 = scmp.eq.s32.totalorder %s34, 3
      %p528 = scmp.ne.s32.totalorder %s523, %s525
      %p529 = scmp.eq.s32.totalorder %s34, 0
      %p530 = por %p528, %p529
      %p531 = scmp.ne.s32.totalorder %s523, %s525
      %p532 = scmp.eq.s32.totalorder %s39, 3
      %p533 = por %p531, %p532
      %p534 = scmp.ne.s32.totalorder %s525, %s526
      %p535 = scmp.eq.s32.totalorder %s39, 0
      %p536 = por %p534, %p535
      %p537 = scmp.ne.s32.totalorder %s525, %s526
      %p538 = scmp.eq.s32.totalorder %s40, 3
      %p539 = por %p537, %p538
      %p541 = scmp.ne.s32.totalorder %s526, %s540
      %p542 = scmp.eq.s32.totalorder %s40, 0
      %p543 = por %p541, %p542
      %s544 = ssub.s32 %s41, %s53
      %p545 = scmp.eq.s32.totalorder %s544, 0
      %s547 = sadd.s32 %s546, 1
      %s548 = scalar_select %p545, %s546, %s547
      %p551 = pneg %p545
      %p552 = scmp.eq.s32.totalorder %s34, 3
      %p553 = por %p551, %p552
      %p554 = scmp.ne.s32.totalorder %s546, %s549
      %p555 = scmp.eq.s32.totalorder %s34, 0
      %p556 = por %p554, %p555
      %p557 = scmp.ne.s32.totalorder %s546, %s549
      %p558 = scmp.eq.s32.totalorder %s39, 3
      %p559 = por %p557, %p558
      %p560 = scmp.ne.s32.totalorder %s549, %s550
      %p561 = scmp.eq.s32.totalorder %s39, 0
      %p562 = por %p560, %p561
      %p563 = scmp.ne.s32.totalorder %s549, %s550
      %p564 = scmp.eq.s32.totalorder %s40, 3
      %p565 = por %p563, %p564
      %p567 = scmp.ne.s32.totalorder %s550, %s566
      %p568 = scmp.eq.s32.totalorder %s40, 0
      %p569 = por %p567, %p568
      %p570 = scmp.le.s32.totalorder 1, %s34
      %p571 = scmp.lt.s32.totalorder %s34, 5
      %p572 = pnand %p570, %p571
      %p573 = pneg %p572
      // Predicated region
      $region9: #{tpu_custom_call.1} parent=5 // pred_check
        _
      $region10: #{tpu_custom_call.1} parent=5 // pred_check_branch
        %575 = sbr.rel (%p572) target = $region12
      $region11: #{tpu_custom_call.1} parent=5 // pred_region
        %s576 = ssub.s32 %s34, 1
        // Predicated region
        $region13: #{tpu_custom_call.1} parent=11 // pred_check
          %p577 = pneg %p93
        $region14: #{tpu_custom_call.1} parent=11 // pred_check_branch
          %579 = sbr.rel (%p577) target = $region16
        $region15: #{tpu_custom_call.1} parent=11 // pred_region
          %581 = vsyncadd [#allocation5], 0
          %s583 = sshll.u32 %s1, 4
          %s584 = int_to_ptr.hbm [resolvable:$true] %s583
          %s585 = sshll.u32 [#allocation4], 4
          %s586 = int_to_ptr.vmem [resolvable:$true] %s585
          %588 = dma.hbm_to_vmem [thread:$0]  %s584, 128, %s586, [#allocation5]
        $region16: #{tpu_custom_call.1} parent=11 // pred_fallthru
          _
        // Predicated region
        $region17: #{tpu_custom_call.1} parent=11 // pred_check
          %p589 = pneg %p140
        $region18: #{tpu_custom_call.1} parent=11 // pred_check_branch
          %591 = sbr.rel (%p589) target = $region20
        $region19: #{tpu_custom_call.1} parent=11 // pred_region
          %593 = vsyncadd [#allocation8], 0
          %s595 = sshll.u32 %s3, 4
          %s596 = int_to_ptr.hbm [resolvable:$true] %s595
          %s597 = sshll.u32 [#allocation9], 4
          %s598 = int_to_ptr.vmem [resolvable:$true] %s597
          %600 = dma.hbm_to_vmem [thread:$0]  %s596, 128, %s598, [#allocation8]
        $region20: #{tpu_custom_call.1} parent=11 // pred_fallthru
          _
        // Predicated region
        $region21: #{tpu_custom_call.1} parent=11 // pred_check
          %p601 = pneg %p161
        $region22: #{tpu_custom_call.1} parent=11 // pred_check_branch
          %603 = sbr.rel (%p601) target = $region24
        $region23: #{tpu_custom_call.1} parent=11 // pred_region
          %605 = vsyncadd [#allocation11], 0
          %s607 = sshll.u32 %s4, 4
          %s608 = int_to_ptr.hbm [resolvable:$true] %s607
          %s609 = sshll.u32 [#allocation10], 4
          %s610 = int_to_ptr.vmem [resolvable:$true] %s609
          %612 = dma.hbm_to_vmem [thread:$0]  %s608, 32, %s610, [#allocation11]
        $region24: #{tpu_custom_call.1} parent=11 // pred_fallthru
          _
        // Predicated region
        $region25: #{tpu_custom_call.1} parent=11 // pred_check
          %p613 = pneg %p182
        $region26: #{tpu_custom_call.1} parent=11 // pred_check_branch
          %615 = sbr.rel (%p613) target = $region28
        $region27: #{tpu_custom_call.1} parent=11 // pred_region
          _
        $region28: #{tpu_custom_call.1} parent=11 // pred_fallthru
          _
        // Predicated region
        $region29: #{tpu_custom_call.1} parent=11 // pred_check
          %p616 = pneg %p515
        $region30: #{tpu_custom_call.1} parent=11 // pred_check_branch
          %618 = sbr.rel (%p616) target = $region32
        $region31: #{tpu_custom_call.1} parent=11 // pred_region
          %620 = vsyncadd [#allocation8], 0
          %s621 = sshll.u32 %s18, 4
          %s622 = int_to_ptr.hbm [resolvable:$true] %s621
          %s623 = sshll.u32 [#allocation19], 4
          %s624 = int_to_ptr.vmem [resolvable:$true] %s623
          %629 = dma.hbm_to_vmem [thread:$0]  %s622, 256, %s624, [#allocation8], 64, 64, 4
        $region32: #{tpu_custom_call.1} parent=11 // pred_fallthru
          _
        // Predicated region
        $region33: #{tpu_custom_call.1} parent=11 // pred_check
          %p630 = pneg %p536
        $region34: #{tpu_custom_call.1} parent=11 // pred_check_branch
          %632 = sbr.rel (%p630) target = $region36
        $region35: #{tpu_custom_call.1} parent=11 // pred_region
          _
        $region36: #{tpu_custom_call.1} parent=11 // pred_fallthru
          _
      $region12: #{tpu_custom_call.1} parent=5 // pred_fallthru
        _
      %p633 = scmp.lt.s32.totalorder %s34, 4
      // Predicated region
      $region37: #{tpu_custom_call.1} parent=5 // pred_check
        %p634 = pneg %p633
      $region38: #{tpu_custom_call.1} parent=5 // pred_check_branch
        %636 = sbr.rel (%p634) target = $region40
      $region39: #{tpu_custom_call.1} parent=5 // pred_region
        // Predicated region
        $region41: #{tpu_custom_call.1} parent=39 // pred_check
          %p637 = pneg %p66
        $region42: #{tpu_custom_call.1} parent=39 // pred_check_branch
          %639 = sbr.rel (%p637) target = $region44
        $region43: #{tpu_custom_call.1} parent=39 // pred_region
          %p640 = scmp.lt.s32.totalorder %s41, 1
          %s641 = scalar_select %p640, %s41, 1
          %s642 = smul.addr %s641, 8
          %s643 = scalar_lea.vmem %s0, %s642
        $region44: #{tpu_custom_call.1} parent=39 // pred_fallthru
          _
        // Predicated region
        $region45: #{tpu_custom_call.1} parent=39 // pred_check
          %p644 = pneg %p113
        $region46: #{tpu_custom_call.1} parent=39 // pred_check_branch
          %646 = sbr.rel (%p644) target = $region48
        $region47: #{tpu_custom_call.1} parent=39 // pred_region
          %s647 = sand.u32 %s34, 1
          %s648 = scalar_lea.sflag [#allocation8], %s647
          %s649 = sand.u32 %s103, 1
          %s650 = scalar_lea.vmem [#allocation7], %s649
          %652 = vsyncadd %s648, 0
          %s653 = scalar_lea.hbm %s2, %s41
          %s655 = sshll.u32 %s653, 4
          %s656 = int_to_ptr.hbm [resolvable:$true] %s655
          %s657 = sshll.u32 %s650, 4
          %s658 = int_to_ptr.vmem [resolvable:$true] %s657
          %660 = dma.hbm_to_vmem [thread:$0]  %s656, 16, %s658, %s648
        $region48: #{tpu_custom_call.1} parent=39 // pred_fallthru
          _
        // Predicated region
        $region49: #{tpu_custom_call.1} parent=39 // pred_check
          %p661 = pneg %p202
        $region50: #{tpu_custom_call.1} parent=39 // pred_check_branch
          %663 = sbr.rel (%p661) target = $region52
        $region51: #{tpu_custom_call.1} parent=39 // pred_region
          %p664 = scmp.lt.s32.totalorder %s42, 1
          %s665 = scalar_select %p664, %s42, 1
          %s666 = smul.addr %s665, 4
          %s667 = smul.addr %s666, 4
          %s668 = scalar_lea.vmem %s6, %s667
        $region52: #{tpu_custom_call.1} parent=39 // pred_fallthru
          _
        // Predicated region
        $region53: #{tpu_custom_call.1} parent=39 // pred_check
          %p669 = pneg %p228
        $region54: #{tpu_custom_call.1} parent=39 // pred_check_branch
          %671 = sbr.rel (%p669) target = $region56
        $region55: #{tpu_custom_call.1} parent=39 // pred_region
          %s672 = sand.u32 %s34, 1
          %s673 = scalar_lea.sflag [#allocation5], %s672
          %s674 = sand.u32 %s218, 1
          %s675 = scalar_lea.vmem [#allocation12], %s674
          %677 = vsyncadd %s673, 0
          %s678 = scalar_lea.hbm %s7, %s42
          %s680 = sshll.u32 %s678, 4
          %s681 = int_to_ptr.hbm [resolvable:$true] %s680
          %s682 = sshll.u32 %s675, 4
          %s683 = int_to_ptr.vmem [resolvable:$true] %s682
          %685 = dma.hbm_to_vmem [thread:$0]  %s681, 16, %s683, %s673
        $region56: #{tpu_custom_call.1} parent=39 // pred_fallthru
          _
        // Predicated region
        $region57: #{tpu_custom_call.1} parent=39 // pred_check
          %p686 = pneg %p254
        $region58: #{tpu_custom_call.1} parent=39 // pred_check_branch
          %688 = sbr.rel (%p686) target = $region60
        $region59: #{tpu_custom_call.1} parent=39 // pred_region
          %p689 = scmp.lt.s32.totalorder %s42, 1
          %s690 = scalar_select %p689, %s42, 1
          %s691 = smul.addr %s690, 4
          %s692 = smul.addr %s691, 4
          %s693 = scalar_lea.vmem %s8, %s692
        $region60: #{tpu_custom_call.1} parent=39 // pred_fallthru
          _
        // Predicated region
        $region61: #{tpu_custom_call.1} parent=39 // pred_check
          %p694 = pneg %p280
        $region62: #{tpu_custom_call.1} parent=39 // pred_check_branch
          %696 = sbr.rel (%p694) target = $region64
        $region63: #{tpu_custom_call.1} parent=39 // pred_region
          %s697 = sand.u32 %s34, 1
          %s698 = scalar_lea.sflag [#allocation8], %s697
          %s699 = sand.u32 %s270, 1
          %s700 = scalar_lea.vmem [#allocation13], %s699
          %702 = vsyncadd %s698, 0
          %s703 = scalar_lea.hbm %s9, %s42
          %s705 = sshll.u32 %s703, 4
          %s706 = int_to_ptr.hbm [resolvable:$true] %s705
          %s707 = sshll.u32 %s700, 4
          %s708 = int_to_ptr.vmem [resolvable:$true] %s707
          %710 = dma.hbm_to_vmem [thread:$0]  %s706, 16, %s708, %s698
        $region64: #{tpu_custom_call.1} parent=39 // pred_fallthru
          _
        // Predicated region
        $region65: #{tpu_custom_call.1} parent=39 // pred_check
          %p711 = pneg %p306
        $region66: #{tpu_custom_call.1} parent=39 // pred_check_branch
          %713 = sbr.rel (%p711) target = $region68
        $region67: #{tpu_custom_call.1} parent=39 // pred_region
          %s714 = sand.u32 %s34, 1
          %s715 = scalar_lea.sflag [#allocation5], %s714
          %s716 = sand.u32 %s296, 1
          %s717 = scalar_lea.vmem [#allocation14], %s716
          %719 = vsyncadd %s715, 0
          %s720 = scalar_lea.hbm %s10, %s42
          %s722 = sshll.u32 %s720, 4
          %s723 = int_to_ptr.hbm [resolvable:$true] %s722
          %s724 = sshll.u32 %s717, 4
          %s725 = int_to_ptr.vmem [resolvable:$true] %s724
          %727 = dma.hbm_to_vmem [thread:$0]  %s723, 16, %s725, %s715
        $region68: #{tpu_custom_call.1} parent=39 // pred_fallthru
          _
        // Predicated region
        $region69: #{tpu_custom_call.1} parent=39 // pred_check
          %p728 = pneg %p332
        $region70: #{tpu_custom_call.1} parent=39 // pred_check_branch
          %730 = sbr.rel (%p728) target = $region72
        $region71: #{tpu_custom_call.1} parent=39 // pred_region
          %s731 = sand.u32 %s34, 1
          %s732 = scalar_lea.sflag [#allocation8], %s731
          %s733 = sand.u32 %s322, 1
          %s734 = scalar_lea.vmem [#allocation15], %s733
          %736 = vsyncadd %s732, 0
          %s737 = scalar_lea.hbm %s11, %s42
          %s739 = sshll.u32 %s737, 4
          %s740 = int_to_ptr.hbm [resolvable:$true] %s739
          %s741 = sshll.u32 %s734, 4
          %s742 = int_to_ptr.vmem [resolvable:$true] %s741
          %744 = dma.hbm_to_vmem [thread:$0]  %s740, 16, %s742, %s732
        $region72: #{tpu_custom_call.1} parent=39 // pred_fallthru
          _
        // Predicated region
        $region73: #{tpu_custom_call.1} parent=39 // pred_check
          %p745 = pneg %p358
        $region74: #{tpu_custom_call.1} parent=39 // pred_check_branch
          %747 = sbr.rel (%p745) target = $region76
        $region75: #{tpu_custom_call.1} parent=39 // pred_region
          %p748 = scmp.lt.s32.totalorder %s42, 1
          %s749 = scalar_select %p748, %s42, 1
          %s750 = smul.addr %s749, 4
          %s751 = smul.addr %s750, 4
          %s752 = scalar_lea.vmem %s12, %s751
        $region76: #{tpu_custom_call.1} parent=39 // pred_fallthru
          _
        // Predicated region
        $region77: #{tpu_custom_call.1} parent=39 // pred_check
          %p753 = pneg %p384
        $region78: #{tpu_custom_call.1} parent=39 // pred_check_branch
          %755 = sbr.rel (%p753) target = $region80
        $region79: #{tpu_custom_call.1} parent=39 // pred_region
          %s756 = sand.u32 %s34, 1
          %s757 = scalar_lea.sflag [#allocation5], %s756
          %s758 = sand.u32 %s374, 1
          %s759 = scalar_lea.vmem [#allocation16], %s758
          %761 = vsyncadd %s757, 0
          %s762 = scalar_lea.hbm %s13, %s42
          %s764 = sshll.u32 %s762, 4
          %s765 = int_to_ptr.hbm [resolvable:$true] %s764
          %s766 = sshll.u32 %s759, 4
          %s767 = int_to_ptr.vmem [resolvable:$true] %s766
          %769 = dma.hbm_to_vmem [thread:$0]  %s765, 16, %s767, %s757
        $region80: #{tpu_custom_call.1} parent=39 // pred_fallthru
          _
        // Predicated region
        $region81: #{tpu_custom_call.1} parent=39 // pred_check
          %p770 = pneg %p410
        $region82: #{tpu_custom_call.1} parent=39 // pred_check_branch
          %772 = sbr.rel (%p770) target = $region84
        $region83: #{tpu_custom_call.1} parent=39 // pred_region
          %p773 = scmp.lt.s32.totalorder %s42, 1
          %s774 = scalar_select %p773, %s42, 1
          %s775 = smul.addr %s774, 8
          %s776 = smul.addr %s775, 4
          %s777 = scalar_lea.vmem %s14, %s776
        $region84: #{tpu_custom_call.1} parent=39 // pred_fallthru
          _
        // Predicated region
        $region85: #{tpu_custom_call.1} parent=39 // pred_check
          %p778 = pneg %p436
        $region86: #{tpu_custom_call.1} parent=39 // pred_check_branch
          %780 = sbr.rel (%p778) target = $region88
        $region87: #{tpu_custom_call.1} parent=39 // pred_region
          %s781 = sand.u32 %s34, 1
          %s782 = scalar_lea.sflag [#allocation8], %s781
          %s783 = sand.u32 %s426, 1
          %s784 = scalar_lea.vmem [#allocation17], %s783
          %786 = vsyncadd %s782, 0
          %s787 = scalar_lea.hbm %s15, %s42
          %s789 = sshll.u32 %s787, 4
          %s790 = int_to_ptr.hbm [resolvable:$true] %s789
          %s791 = sshll.u32 %s784, 4
          %s792 = int_to_ptr.vmem [resolvable:$true] %s791
          %794 = dma.hbm_to_vmem [thread:$0]  %s790, 16, %s792, %s782
        $region88: #{tpu_custom_call.1} parent=39 // pred_fallthru
          _
        // Predicated region
        $region89: #{tpu_custom_call.1} parent=39 // pred_check
          %p795 = pneg %p462
        $region90: #{tpu_custom_call.1} parent=39 // pred_check_branch
          %797 = sbr.rel (%p795) target = $region92
        $region91: #{tpu_custom_call.1} parent=39 // pred_region
          %p798 = scmp.lt.s32.totalorder %s42, 1
          %s799 = scalar_select %p798, %s42, 1
          %s800 = scalar_lea.vmem %s16, %s799
        $region92: #{tpu_custom_call.1} parent=39 // pred_fallthru
          _
        // Predicated region
        $region93: #{tpu_custom_call.1} parent=39 // pred_check
          %p801 = pneg %p488
        $region94: #{tpu_custom_call.1} parent=39 // pred_check_branch
          %803 = sbr.rel (%p801) target = $region96
        $region95: #{tpu_custom_call.1} parent=39 // pred_region
          %s804 = sand.u32 %s34, 1
          %s805 = scalar_lea.sflag [#allocation5], %s804
          %s806 = sand.u32 %s478, 1
          %s807 = scalar_lea.vmem [#allocation18], %s806
          %809 = vsyncadd %s805, 0
          %s810 = scalar_lea.hbm %s17, %s42
          %s812 = sshll.u32 %s810, 4
          %s813 = int_to_ptr.hbm [resolvable:$true] %s812
          %s814 = sshll.u32 %s807, 4
          %s815 = int_to_ptr.vmem [resolvable:$true] %s814
          %817 = dma.hbm_to_vmem [thread:$0]  %s813, 16, %s815, %s805
        $region96: #{tpu_custom_call.1} parent=39 // pred_fallthru
          _
      $region40: #{tpu_custom_call.1} parent=5 // pred_fallthru
        _
      %p818 = scmp.le.s32.totalorder 1, %s34
      %p819 = scmp.lt.s32.totalorder %s34, 5
      %p820 = pnand %p818, %p819
      %p821 = pneg %p820
      // Predicated region
      $region97: #{tpu_custom_call.1} parent=5 // pred_check
        _
      $region98: #{tpu_custom_call.1} parent=5 // pred_check_branch
        %823 = sbr.rel (%p820) target = $region100
      $region99: #{tpu_custom_call.1} parent=5 // pred_region
        %s824 = ssub.s32 %s34, 1
        // Predicated region
        $region101: #{tpu_custom_call.1} parent=99 // pred_check
          %p825 = pneg %p93
        $region102: #{tpu_custom_call.1} parent=99 // pred_check_branch
          %827 = sbr.rel (%p825) target = $region104
        $region103: #{tpu_custom_call.1} parent=99 // pred_region
          %829 = dma.done [#allocation5], 128
        $region104: #{tpu_custom_call.1} parent=99 // pred_fallthru
          _
        %s830 = sand.u32 %s39, 1
        %s831 = scalar_lea.sflag [#allocation8], %s830
        %s832 = sand.u32 %s106, 1
        %s833 = scalar_lea.vmem [#allocation7], %s832
        // Predicated region
        $region105: #{tpu_custom_call.1} parent=99 // pred_check
          %p834 = pneg %p119
        $region106: #{tpu_custom_call.1} parent=99 // pred_check_branch
          %836 = sbr.rel (%p834) target = $region108
        $region107: #{tpu_custom_call.1} parent=99 // pred_region
          %838 = dma.done %s831, 16
        $region108: #{tpu_custom_call.1} parent=99 // pred_fallthru
          _
        // Predicated region
        $region109: #{tpu_custom_call.1} parent=99 // pred_check
          %p839 = pneg %p140
        $region110: #{tpu_custom_call.1} parent=99 // pred_check_branch
          %841 = sbr.rel (%p839) target = $region112
        $region111: #{tpu_custom_call.1} parent=99 // pred_region
          %843 = dma.done [#allocation8], 128
        $region112: #{tpu_custom_call.1} parent=99 // pred_fallthru
          _
        // Predicated region
        $region113: #{tpu_custom_call.1} parent=99 // pred_check
          %p844 = pneg %p161
        $region114: #{tpu_custom_call.1} parent=99 // pred_check_branch
          %846 = sbr.rel (%p844) target = $region116
        $region115: #{tpu_custom_call.1} parent=99 // pred_region
          %848 = dma.done [#allocation11], 32
        $region116: #{tpu_custom_call.1} parent=99 // pred_fallthru
          _
        %s849 = sand.u32 %s39, 1
        %s850 = scalar_lea.sflag [#allocation5], %s849
        %s851 = sand.u32 %s221, 1
        %s852 = scalar_lea.vmem [#allocation12], %s851
        // Predicated region
        $region117: #{tpu_custom_call.1} parent=99 // pred_check
          %p853 = pneg %p234
        $region118: #{tpu_custom_call.1} parent=99 // pred_check_branch
          %855 = sbr.rel (%p853) target = $region120
        $region119: #{tpu_custom_call.1} parent=99 // pred_region
          %857 = dma.done %s850, 16
        $region120: #{tpu_custom_call.1} parent=99 // pred_fallthru
          _
        %s858 = sand.u32 %s39, 1
        %s859 = scalar_lea.sflag [#allocation8], %s858
        %s860 = sand.u32 %s273, 1
        %s861 = scalar_lea.vmem [#allocation13], %s860
        // Predicated region
        $region121: #{tpu_custom_call.1} parent=99 // pred_check
          %p862 = pneg %p286
        $region122: #{tpu_custom_call.1} parent=99 // pred_check_branch
          %864 = sbr.rel (%p862) target = $region124
        $region123: #{tpu_custom_call.1} parent=99 // pred_region
          %866 = dma.done %s859, 16
        $region124: #{tpu_custom_call.1} parent=99 // pred_fallthru
          _
        %s867 = sand.u32 %s39, 1
        %s868 = scalar_lea.sflag [#allocation5], %s867
        %s869 = sand.u32 %s299, 1
        %s870 = scalar_lea.vmem [#allocation14], %s869
        // Predicated region
        $region125: #{tpu_custom_call.1} parent=99 // pred_check
          %p871 = pneg %p312
        $region126: #{tpu_custom_call.1} parent=99 // pred_check_branch
          %873 = sbr.rel (%p871) target = $region128
        $region127: #{tpu_custom_call.1} parent=99 // pred_region
          %875 = dma.done %s868, 16
        $region128: #{tpu_custom_call.1} parent=99 // pred_fallthru
          _
        %s876 = sand.u32 %s39, 1
        %s877 = scalar_lea.sflag [#allocation8], %s876
        %s878 = sand.u32 %s325, 1
        %s879 = scalar_lea.vmem [#allocation15], %s878
        // Predicated region
        $region129: #{tpu_custom_call.1} parent=99 // pred_check
          %p880 = pneg %p338
        $region130: #{tpu_custom_call.1} parent=99 // pred_check_branch
          %882 = sbr.rel (%p880) target = $region132
        $region131: #{tpu_custom_call.1} parent=99 // pred_region
          %884 = dma.done %s877, 16
        $region132: #{tpu_custom_call.1} parent=99 // pred_fallthru
          _
        %s885 = sand.u32 %s39, 1
        %s886 = scalar_lea.sflag [#allocation5], %s885
        %s887 = sand.u32 %s377, 1
        %s888 = scalar_lea.vmem [#allocation16], %s887
        // Predicated region
        $region133: #{tpu_custom_call.1} parent=99 // pred_check
          %p889 = pneg %p390
        $region134: #{tpu_custom_call.1} parent=99 // pred_check_branch
          %891 = sbr.rel (%p889) target = $region136
        $region135: #{tpu_custom_call.1} parent=99 // pred_region
          %893 = dma.done %s886, 16
        $region136: #{tpu_custom_call.1} parent=99 // pred_fallthru
          _
        %s894 = sand.u32 %s39, 1
        %s895 = scalar_lea.sflag [#allocation8], %s894
        %s896 = sand.u32 %s429, 1
        %s897 = scalar_lea.vmem [#allocation17], %s896
        // Predicated region
        $region137: #{tpu_custom_call.1} parent=99 // pred_check
          %p898 = pneg %p442
        $region138: #{tpu_custom_call.1} parent=99 // pred_check_branch
          %900 = sbr.rel (%p898) target = $region140
        $region139: #{tpu_custom_call.1} parent=99 // pred_region
          %902 = dma.done %s895, 16
        $region140: #{tpu_custom_call.1} parent=99 // pred_fallthru
          _
        %s903 = sand.u32 %s39, 1
        %s904 = scalar_lea.sflag [#allocation5], %s903
        %s905 = sand.u32 %s481, 1
        %s906 = scalar_lea.vmem [#allocation18], %s905
        // Predicated region
        $region141: #{tpu_custom_call.1} parent=99 // pred_check
          %p907 = pneg %p494
        $region142: #{tpu_custom_call.1} parent=99 // pred_check_branch
          %909 = sbr.rel (%p907) target = $region144
        $region143: #{tpu_custom_call.1} parent=99 // pred_region
          %911 = dma.done %s904, 16
        $region144: #{tpu_custom_call.1} parent=99 // pred_fallthru
          _
        // Predicated region
        $region145: #{tpu_custom_call.1} parent=99 // pred_check
          %p912 = pneg %p515
        $region146: #{tpu_custom_call.1} parent=99 // pred_check_branch
          %914 = sbr.rel (%p912) target = $region148
        $region147: #{tpu_custom_call.1} parent=99 // pred_region
          %916 = dma.done [#allocation8], 256
        $region148: #{tpu_custom_call.1} parent=99 // pred_fallthru
          _
        %p917 = scmp.lt.s32.totalorder %s43, 1
        %s918 = scalar_select %p917, %s43, 1
        %s919 = smul.addr %s918, 8
        %s920 = scalar_lea.vmem %s0, %s919
        %p921 = pneg %p72
        %p922 = pneg %p69
        %p923 = pneg %p93
        %p924 = pneg %p90
        %s925 = sand.u32 %s39, 1
        %s926 = scalar_lea.sflag [#allocation8], %s925
        %s927 = sand.u32 %s106, 1
        %s928 = scalar_lea.vmem [#allocation7], %s927
        %p929 = pneg %p119
        %p930 = pneg %p116
        %p931 = pneg %p140
        %p932 = pneg %p137
        %p933 = pneg %p161
        %p934 = pneg %p158
        %p935 = pneg %p182
        %p936 = pneg %p179
        %p937 = scmp.lt.s32.totalorder %s44, 1
        %s938 = scalar_select %p937, %s44, 1
        %s939 = smul.addr %s938, 4
        %s940 = smul.addr %s939, 4
        %s941 = scalar_lea.vmem %s6, %s940
        %p942 = pneg %p208
        %p943 = pneg %p205
        %s944 = sand.u32 %s39, 1
        %s945 = scalar_lea.sflag [#allocation5], %s944
        %s946 = sand.u32 %s221, 1
        %s947 = scalar_lea.vmem [#allocation12], %s946
        %p948 = pneg %p234
        %p949 = pneg %p231
        %p950 = scmp.lt.s32.totalorder %s44, 1
        %s951 = scalar_select %p950, %s44, 1
        %s952 = smul.addr %s951, 4
        %s953 = smul.addr %s952, 4
        %s954 = scalar_lea.vmem %s8, %s953
        %p955 = pneg %p260
        %p956 = pneg %p257
        %s957 = sand.u32 %s39, 1
        %s958 = scalar_lea.sflag [#allocation8], %s957
        %s959 = sand.u32 %s273, 1
        %s960 = scalar_lea.vmem [#allocation13], %s959
        %p961 = pneg %p286
        %p962 = pneg %p283
        %s963 = sand.u32 %s39, 1
        %s964 = scalar_lea.sflag [#allocation5], %s963
        %s965 = sand.u32 %s299, 1
        %s966 = scalar_lea.vmem [#allocation14], %s965
        %p967 = pneg %p312
        %p968 = pneg %p309
        %s969 = sand.u32 %s39, 1
        %s970 = scalar_lea.sflag [#allocation8], %s969
        %s971 = sand.u32 %s325, 1
        %s972 = scalar_lea.vmem [#allocation15], %s971
        %p973 = pneg %p338
        %p974 = pneg %p335
        %p975 = scmp.lt.s32.totalorder %s44, 1
        %s976 = scalar_select %p975, %s44, 1
        %s977 = smul.addr %s976, 4
        %s978 = smul.addr %s977, 4
        %s979 = scalar_lea.vmem %s12, %s978
        %p980 = pneg %p364
        %p981 = pneg %p361
        %s982 = sand.u32 %s39, 1
        %s983 = scalar_lea.sflag [#allocation5], %s982
        %s984 = sand.u32 %s377, 1
        %s985 = scalar_lea.vmem [#allocation16], %s984
        %p986 = pneg %p390
        %p987 = pneg %p387
        %p988 = scmp.lt.s32.totalorder %s44, 1
        %s989 = scalar_select %p988, %s44, 1
        %s990 = smul.addr %s989, 8
        %s991 = smul.addr %s990, 4
        %s992 = scalar_lea.vmem %s14, %s991
        %p993 = pneg %p416
        %p994 = pneg %p413
        %s995 = sand.u32 %s39, 1
        %s996 = scalar_lea.sflag [#allocation8], %s995
        %s997 = sand.u32 %s429, 1
        %s998 = scalar_lea.vmem [#allocation17], %s997
        %p999 = pneg %p442
        %p1000 = pneg %p439
        %p1001 = scmp.lt.s32.totalorder %s44, 1
        %s1002 = scalar_select %p1001, %s44, 1
        %s1003 = scalar_lea.vmem %s16, %s1002
        %p1004 = pneg %p468
        %p1005 = pneg %p465
        %s1006 = sand.u32 %s39, 1
        %s1007 = scalar_lea.sflag [#allocation5], %s1006
        %s1008 = sand.u32 %s481, 1
        %s1009 = scalar_lea.vmem [#allocation18], %s1008
        %p1010 = pneg %p494
        %p1011 = pneg %p491
        %p1012 = pneg %p515
        %p1013 = pneg %p512
        %p1014 = pneg %p536
        %p1015 = pneg %p533
        %p1016 = pneg %p562
        %p1017 = pneg %p559
        %s1018 = sand.u32 %s549, 1
        %s1019 = scalar_lea.sflag [#allocation6], %s1018
        %s1020 = sand.u32 %s549, 1
        %s1021 = smul.addr %s1020, 8
        %s1022 = scalar_lea.vmem [#allocation20], %s1021
        %p1023 = scmp.lt.s32.totalorder %s43, 1
        %s1024 = scalar_select %p1023, %s43, 1
        %s1025 = smul.addr %s1024, 8
        %s1026 = scalar_lea.vmem %s0, %s1025
        %p1027 = scmp.lt.s32.totalorder %s44, 1
        %s1028 = scalar_select %p1027, %s44, 1
        %s1029 = smul.addr %s1028, 4
        %s1030 = smul.addr %s1029, 4
        %s1031 = scalar_lea.vmem %s6, %s1030
        %p1032 = scmp.lt.s32.totalorder %s44, 1
        %s1033 = scalar_select %p1032, %s44, 1
        %s1034 = smul.addr %s1033, 4
        %s1035 = smul.addr %s1034, 4
        %s1036 = scalar_lea.vmem %s8, %s1035
        %p1037 = scmp.lt.s32.totalorder %s44, 1
        %s1038 = scalar_select %p1037, %s44, 1
        %s1039 = smul.addr %s1038, 4
        %s1040 = smul.addr %s1039, 4
        %s1041 = scalar_lea.vmem %s12, %s1040
        %p1042 = scmp.lt.s32.totalorder %s44, 1
        %s1043 = scalar_select %p1042, %s44, 1
        %s1044 = smul.addr %s1043, 8
        %s1045 = smul.addr %s1044, 4
        %s1046 = scalar_lea.vmem %s14, %s1045
        %p1047 = scmp.lt.s32.totalorder %s44, 1
        %s1048 = scalar_select %p1047, %s44, 1
        %s1049 = scalar_lea.vmem %s16, %s1048
        %p1051 = scmp.eq.s32.totalorder %s44, 0
        // Predicated region
        $region149: #{tpu_custom_call.1} parent=99 // pred_check
          %p1052 = pneg %p1051
        $region150: #{tpu_custom_call.1} parent=99 // pred_check_branch
          %1054 = sbr.rel (%p1052) target = $region152
        $region151: #{tpu_custom_call.1} parent=99 // pred_region
          %v1055 = vld [vmem:[%s1026] sm:$0xff]
          %v1056 = vpack.c.bf16 %v1055, %v1055
          %v1057 = vld [vmem:[#allocation10] sm:$0x3]
          %v1058 = vld [vmem:[%s5] sm:$0x1]
          %v1060 = vperm.slane %v1058, 0
          %vm1062 = vcmask 31744
          %v1064 = vsel %vm1062, %v1056, 0
          %vm1066 = vcmask 1041408
          %v1068 = vsel %vm1066, %v1057, 0
          %1070 = vmatpush.bf16.msra.mxu0 0
          %1071 = vmatpush.bf16.msra.mxu0 0
          %1072 = vmatpush.bf16.msra.mxu0 0
          %1073 = vmatpush.bf16.msra.mxu0 0
          %1074 = vmatpush.bf16.msra.mxu0 0
          %1075 = vmatpush.bf16.msra.mxu0 0
          %1076 = vmatpush.bf16.msra.mxu0 0
          %1077 = vmatpush.bf16.msra.mxu0 %v1068
          %1078 = vmatmul.bf16.gmra.mxu0 %v1064
          %v1079 = vpop.f32.mrf.mxu0
          %v1080 = vadd.f32 %v1060, %v1079
          %v1081 = vpop.f32.mrf.mxu0
          %1082 = vdwg.mxu0
          %v1083 = vld [vmem:[#allocation9] sm:$0xff]
          %v1084 = vadd.f32 %v1080, %v1083
          %vm1085 = vcmask 261120
          %1086 = vst.msk [vmem:[#allocation2] sm:$0xff] %vm1085, %v1084
          %v1087 = vld [vmem:[#allocation4] sm:$0xff]
          %v1088 = vld [vmem:[%s833] sm:$0x1]
          %v1090 = vperm.slane %v1088, 0
          %v1092 = vadd.f32 %v1087, %v1090
          %vm1093 = vcmask 64512
          %1094 = vst.msk [vmem:[#allocation3] sm:$0xff] %vm1093, %v1092
        $region152: #{tpu_custom_call.1} parent=99 // pred_fallthru
          _
        %v1095 = vld [vmem:[#allocation2] sm:$0xff]
        %v1096 = vld [vmem:[#allocation3] sm:$0xff]
        %v1097 = vpack.c.bf16 %v1095, %v1095
        %v1098 = vld [vmem:[%s1031] sm:$0xf]
        %v1099 = vld [vmem:[%s1031 + $0x4] sm:$0xf]
        %v1100 = vld [vmem:[%s1031 + $0x8] sm:$0xf]
        %v1101 = vld [vmem:[%s1031 + $0xc] sm:$0xf]
        %v1102 = vld [vmem:[%s852] sm:$0x1]
        %v1104 = vperm.slane %v1102, 0
        %v1110 = vunpack.c.l.b16 %v1098
        %v1111 = vunpack.c.l.b16 %v1099
        %v1112 = vunpack.c.l.b16 %v1100
        %v1113 = vunpack.c.l.b16 %v1101
        %v1114 = vpack.c.b16 %v1111, %v1110
        %v1115 = vpack.c.b16 %v1113, %v1112
        %vm1118 = vcmask 261120
        %v1120 = vsel %vm1118, %v1097, 0
        %1122 = vmatpush.bf16.msra.mxu0 0
        %1123 = vmatpush.bf16.msra.mxu0 0
        %1124 = vmatpush.bf16.msra.mxu0 0
        %1125 = vmatpush.bf16.msra.mxu0 0
        %1126 = vmatpush.bf16.msra.mxu0 0
        %1127 = vmatpush.bf16.msra.mxu0 0
        %1128 = vmatpush.bf16.msra.mxu0 %v1115
        %1129 = vmatpush.bf16.msra.mxu0 %v1114
        %1130 = vmatmul.bf16.gmra.mxu0 %v1120
        %v1131 = vpop.f32.mrf.mxu0
        %v1132 = vadd.f32 %v1104, %v1131
        %v1133 = vpop.f32.mrf.mxu0
        %1134 = vdwg.mxu0
        %v1135 = vmul.f32 %v1132, 0.35355338
        %v1136 = vpack.c.bf16 %v1135, %v1135
        %v1137 = vpack.c.bf16 %v1132, %v1132
        %1139 = vrot.lane.b32.xlu0 %v1136, 120
        %v1140 = vpop.permute.xlu0 %1139
        %1141 = vrot.lane.b32.xlu0 %v1136, 112
        %v1142 = vpop.permute.xlu0 %1141
        %1143 = vrot.lane.b32.xlu0 %v1136, 104
        %v1144 = vpop.permute.xlu0 %1143
        %1146 = vrot.lane.b32.xlu0 %v1137, 120
        %v1147 = vpop.permute.xlu0 %1146
        %1148 = vrot.lane.b32.xlu0 %v1137, 112
        %v1149 = vpop.permute.xlu0 %1148
        %1150 = vrot.lane.b32.xlu0 %v1137, 104
        %v1151 = vpop.permute.xlu0 %1150
        %v1152 = vunpack.c.l.b16 %v1137
        %v1153 = vpack.c.b16 %v1152, %v1152
        %1154 = vrot.lane.b32.xlu0 %v1153, 96
        %v1155 = vpop.permute.xlu0 %1154
        %vm1156 = vcmask 64512
        %v1158 = vsel %vm1156, %v1136, 0
        %v1161 = vsel %vm1156, %v1155, 0
        %1163 = vmatpush.bf16.xpose.msra.mxu0 0
        %1164 = vmatpush.bf16.xpose.msra.mxu0 0
        %1165 = vmatpush.bf16.xpose.msra.mxu0 0
        %1166 = vmatpush.bf16.xpose.msra.mxu0 0
        %1167 = vmatpush.bf16.xpose.msra.mxu0 0
        %1168 = vmatpush.bf16.xpose.msra.mxu0 0
        %1169 = vmatpush.bf16.xpose.msra.mxu0 0
        %1170 = vmatpush.bf16.xpose.msra.mxu0 %v1161
        %1171 = vmatmul.bf16.gmra.mxu0 %v1158
        %v1172 = vpop.f32.mrf.mxu0
        %v1173 = vadd.f32 %v1096, %v1172
        %v1174 = vpop.f32.mrf.mxu0
        %1175 = vdwg.mxu0
        %v1176 = vunpack.c.l.b16 %v1147
        %v1177 = vpack.c.b16 %v1176, %v1176
        %1178 = vrot.lane.b32.xlu0 %v1177, 96
        %v1179 = vpop.permute.xlu0 %1178
        %v1181 = vsel %vm1156, %v1140, 0
        %v1184 = vsel %vm1156, %v1179, 0
        %1186 = vmatpush.bf16.xpose.msra.mxu0 0
        %1187 = vmatpush.bf16.xpose.msra.mxu0 0
        %1188 = vmatpush.bf16.xpose.msra.mxu0 0
        %1189 = vmatpush.bf16.xpose.msra.mxu0 0
        %1190 = vmatpush.bf16.xpose.msra.mxu0 0
        %1191 = vmatpush.bf16.xpose.msra.mxu0 0
        %1192 = vmatpush.bf16.xpose.msra.mxu0 0
        %1193 = vmatpush.bf16.xpose.msra.mxu0 %v1184
        %1194 = vmatmul.bf16.gmra.mxu0 %v1181
        %v1195 = vpop.f32.mrf.mxu0
        %v1196 = vadd.f32 %v1096, %v1195
        %v1197 = vpop.f32.mrf.mxu0
        %1198 = vdwg.mxu0
        %v1199 = vunpack.c.l.b16 %v1149
        %v1200 = vpack.c.b16 %v1199, %v1199
        %1201 = vrot.lane.b32.xlu0 %v1200, 96
        %v1202 = vpop.permute.xlu0 %1201
        %v1204 = vsel %vm1156, %v1142, 0
        %v1207 = vsel %vm1156, %v1202, 0
        %1209 = vmatpush.bf16.xpose.msra.mxu0 0
        %1210 = vmatpush.bf16.xpose.msra.mxu0 0
        %1211 = vmatpush.bf16.xpose.msra.mxu0 0
        %1212 = vmatpush.bf16.xpose.msra.mxu0 0
        %1213 = vmatpush.bf16.xpose.msra.mxu0 0
        %1214 = vmatpush.bf16.xpose.msra.mxu0 0
        %1215 = vmatpush.bf16.xpose.msra.mxu0 0
        %1216 = vmatpush.bf16.xpose.msra.mxu0 %v1207
        %1217 = vmatmul.bf16.gmra.mxu0 %v1204
        %v1218 = vpop.f32.mrf.mxu0
        %v1219 = vadd.f32 %v1096, %v1218
        %v1220 = vpop.f32.mrf.mxu0
        %1221 = vdwg.mxu0
        %v1222 = vunpack.c.l.b16 %v1151
        %v1223 = vpack.c.b16 %v1222, %v1222
        %1224 = vrot.lane.b32.xlu0 %v1223, 96
        %v1225 = vpop.permute.xlu0 %1224
        %v1227 = vsel %vm1156, %v1144, 0
        %v1230 = vsel %vm1156, %v1225, 0
        %1232 = vmatpush.bf16.xpose.msra.mxu0 0
        %1233 = vmatpush.bf16.xpose.msra.mxu0 0
        %1234 = vmatpush.bf16.xpose.msra.mxu0 0
        %1235 = vmatpush.bf16.xpose.msra.mxu0 0
        %1236 = vmatpush.bf16.xpose.msra.mxu0 0
        %1237 = vmatpush.bf16.xpose.msra.mxu0 0
        %1238 = vmatpush.bf16.xpose.msra.mxu0 0
        %1239 = vmatpush.bf16.xpose.msra.mxu0 %v1230
        %1240 = vmatmul.bf16.gmra.mxu0 %v1227
        %v1241 = vpop.f32.mrf.mxu0
        %v1242 = vadd.f32 %v1096, %v1241
        %v1243 = vpop.f32.mrf.mxu0
        %1244 = vdwg.mxu0
        %v1245 = vsel %vm1156, %v1173, -inf
        %1246 = vmax.xlane.f32.xlu0 %v1245
        %v1247 = vpop.xlane.xlu0 %1246
        %v1248 = vsel %vm1156, %v1196, -inf
        %1249 = vmax.xlane.f32.xlu0 %v1248
        %v1250 = vpop.xlane.xlu0 %1249
        %v1251 = vsel %vm1156, %v1219, -inf
        %1252 = vmax.xlane.f32.xlu0 %v1251
        %v1253 = vpop.xlane.xlu0 %1252
        %v1254 = vsel %vm1156, %v1242, -inf
        %1255 = vmax.xlane.f32.xlu0 %v1254
        %v1256 = vpop.xlane.xlu0 %1255
        %v1257 = vsub.f32 %v1173, %v1247
        %v1258 = vsub.f32 %v1196, %v1250
        %v1259 = vsub.f32 %v1219, %v1253
        %v1260 = vsub.f32 %v1242, %v1256
        %v1261 = vmul.f32 %v1257, 1.442695
        %v1262 = vpow.pop %v1261
        %v1263 = vmul.f32 %v1258, 1.442695
        %v1264 = vpow.pop %v1263
        %v1265 = vmul.f32 %v1259, 1.442695
        %v1266 = vpow.pop %v1265
        %v1267 = vmul.f32 %v1260, 1.442695
        %v1268 = vpow.pop %v1267
        %v1269 = vsel %vm1156, %v1262, 0.0
        %1270 = vadd.xlane.f32.xlu0 %v1269
        %v1271 = vpop.xlane.xlu0 %1270
        %v1272 = vsel %vm1156, %v1264, 0.0
        %1273 = vadd.xlane.f32.xlu0 %v1272
        %v1274 = vpop.xlane.xlu0 %1273
        %v1275 = vsel %vm1156, %v1266, 0.0
        %1276 = vadd.xlane.f32.xlu0 %v1275
        %v1277 = vpop.xlane.xlu0 %1276
        %v1278 = vsel %vm1156, %v1268, 0.0
        %1279 = vadd.xlane.f32.xlu0 %v1278
        %v1280 = vpop.xlane.xlu0 %1279
        %v1281 = vrcp.pop %v1271
        %v1282 = vrcp.pop %v1274
        %v1283 = vrcp.pop %v1277
        %v1284 = vrcp.pop %v1280
        %v1285 = vmul.f32 %v1262, %v1281
        %v1286 = vmul.f32 %v1264, %v1282
        %v1287 = vmul.f32 %v1266, %v1283
        %v1288 = vmul.f32 %v1268, %v1284
        %v1289 = vpack.c.bf16 %v1285, %v1285
        %v1290 = vpack.c.bf16 %v1286, %v1286
        %v1291 = vpack.c.bf16 %v1287, %v1287
        %v1292 = vpack.c.bf16 %v1288, %v1288
        %1293 = vrot.lane.b32.xlu0 %v1153, 64
        %v1294 = vpop.permute.xlu0 %1293
        %v1296 = vsel %vm1156, %v1289, 0
        %vm1298 = vcmask 1043456
        %v1300 = vsel %vm1298, %v1294, 0
        %1302 = vmatpush.bf16.msra.mxu0 0
        %1303 = vmatpush.bf16.msra.mxu0 0
        %1304 = vmatpush.bf16.msra.mxu0 0
        %1305 = vmatpush.bf16.msra.mxu0 0
        %1306 = vmatpush.bf16.msra.mxu0 0
        %1307 = vmatpush.bf16.msra.mxu0 0
        %1308 = vmatpush.bf16.msra.mxu0 0
        %1309 = vmatpush.bf16.msra.mxu0 %v1300
        %1310 = vmatmul.bf16.gmra.mxu0 %v1296
        %v1311 = vpop.f32.mrf.mxu0
        %v1312 = vadd.f32 0.0, %v1311
        %v1313 = vpop.f32.mrf.mxu0
        %1314 = vdwg.mxu0
        %1315 = vrot.lane.b32.xlu0 %v1177, 64
        %v1316 = vpop.permute.xlu0 %1315
        %v1318 = vsel %vm1156, %v1290, 0
        %v1321 = vsel %vm1298, %v1316, 0
        %1323 = vmatpush.bf16.msra.mxu0 0
        %1324 = vmatpush.bf16.msra.mxu0 0
        %1325 = vmatpush.bf16.msra.mxu0 0
        %1326 = vmatpush.bf16.msra.mxu0 0
        %1327 = vmatpush.bf16.msra.mxu0 0
        %1328 = vmatpush.bf16.msra.mxu0 0
        %1329 = vmatpush.bf16.msra.mxu0 0
        %1330 = vmatpush.bf16.msra.mxu0 %v1321
        %1331 = vmatmul.bf16.gmra.mxu0 %v1318
        %v1332 = vpop.f32.mrf.mxu0
        %v1333 = vadd.f32 0.0, %v1332
        %v1334 = vpop.f32.mrf.mxu0
        %1335 = vdwg.mxu0
        %1336 = vrot.lane.b32.xlu0 %v1200, 64
        %v1337 = vpop.permute.xlu0 %1336
        %v1339 = vsel %vm1156, %v1291, 0
        %v1342 = vsel %vm1298, %v1337, 0
        %1344 = vmatpush.bf16.msra.mxu0 0
        %1345 = vmatpush.bf16.msra.mxu0 0
        %1346 = vmatpush.bf16.msra.mxu0 0
        %1347 = vmatpush.bf16.msra.mxu0 0
        %1348 = vmatpush.bf16.msra.mxu0 0
        %1349 = vmatpush.bf16.msra.mxu0 0
        %1350 = vmatpush.bf16.msra.mxu0 0
        %1351 = vmatpush.bf16.msra.mxu0 %v1342
        %1352 = vmatmul.bf16.gmra.mxu0 %v1339
        %v1353 = vpop.f32.mrf.mxu0
        %v1354 = vadd.f32 0.0, %v1353
        %v1355 = vpop.f32.mrf.mxu0
        %1356 = vdwg.mxu0
        %1357 = vrot.lane.b32.xlu0 %v1223, 64
        %v1358 = vpop.permute.xlu0 %1357
        %v1360 = vsel %vm1156, %v1292, 0
        %v1363 = vsel %vm1298, %v1358, 0
        %1365 = vmatpush.bf16.msra.mxu0 0
        %1366 = vmatpush.bf16.msra.mxu0 0
        %1367 = vmatpush.bf16.msra.mxu0 0
        %1368 = vmatpush.bf16.msra.mxu0 0
        %1369 = vmatpush.bf16.msra.mxu0 0
        %1370 = vmatpush.bf16.msra.mxu0 0
        %1371 = vmatpush.bf16.msra.mxu0 0
        %1372 = vmatpush.bf16.msra.mxu0 %v1363
        %1373 = vmatmul.bf16.gmra.mxu0 %v1360
        %v1374 = vpop.f32.mrf.mxu0
        %v1375 = vadd.f32 0.0, %v1374
        %v1376 = vpop.f32.mrf.mxu0
        %1377 = vdwg.mxu0
        %1379 = vrot.lane.b32.xlu0 %v1333, 8
        %v1380 = vpop.permute.xlu0 %1379
        %1383 = vrot.lane.b32.xlu0 %v1354, 16
        %v1384 = vpop.permute.xlu0 %1383
        %1387 = vrot.lane.b32.xlu0 %v1375, 24
        %v1388 = vpop.permute.xlu0 %1387
        %v1390 = vsel %vm1156, %v1312, %v1380
        %vm1391 = vcmask 130048
        %v1392 = vsel %vm1391, %v1390, %v1384
        %vm1393 = vcmask 195584
        %v1394 = vsel %vm1393, %v1392, %v1388
        %v1395 = vpack.c.bf16 %v1394, %v1394
        %v1396 = vld [vmem:[%s1036] sm:$0xf]
        %v1397 = vld [vmem:[%s1036 + $0x4] sm:$0xf]
        %v1398 = vld [vmem:[%s1036 + $0x8] sm:$0xf]
        %v1399 = vld [vmem:[%s1036 + $0xc] sm:$0xf]
        %v1400 = vld [vmem:[%s861] sm:$0x1]
        %v1402 = vperm.slane %v1400, 0
        %v1408 = vunpack.c.l.b16 %v1396
        %v1409 = vunpack.c.l.b16 %v1397
        %v1410 = vunpack.c.l.b16 %v1398
        %v1411 = vunpack.c.l.b16 %v1399
        %v1412 = vpack.c.b16 %v1409, %v1408
        %v1413 = vpack.c.b16 %v1411, %v1410
        %v1417 = vsel %vm1118, %v1395, 0
        %1419 = vmatpush.bf16.msra.mxu0 0
        %1420 = vmatpush.bf16.msra.mxu0 0
        %1421 = vmatpush.bf16.msra.mxu0 0
        %1422 = vmatpush.bf16.msra.mxu0 0
        %1423 = vmatpush.bf16.msra.mxu0 0
        %1424 = vmatpush.bf16.msra.mxu0 0
        %1425 = vmatpush.bf16.msra.mxu0 %v1413
        %1426 = vmatpush.bf16.msra.mxu0 %v1412
        %1427 = vmatmul.bf16.gmra.mxu0 %v1417
        %v1428 = vpop.f32.mrf.mxu0
        %v1429 = vadd.f32 %v1402, %v1428
        %v1430 = vpop.f32.mrf.mxu0
        %1431 = vdwg.mxu0
        %v1432 = vadd.f32 %v1095, %v1429
        %v1433 = vld [vmem:[%s870] sm:$0x1]
        %v1434 = vld [vmem:[%s879] sm:$0x1]
        %v1435 = vsel %vm1118, %v1432, 0.0
        %1436 = vadd.xlane.f32.xlu0 %v1435
        %v1437 = vpop.xlane.xlu0 %1436
        %v1438 = vrcp.pop 32.0
        %v1439 = vmul.f32 32.0, %v1438
        %v1440 = vsub.f32 1.0, %v1439
        %v1441 = vmul.f32 %v1438, %v1440
        %v1442 = vadd.f32 %v1438, %v1441
        %vm1443 = vweird.f32 %v1438
        %v1444 = vsel %vm1443, %v1438, %v1442
        %v1445 = vmul.f32 %v1437, %v1444
        %v1446 = vsub.f32 %v1432, %v1445
        %v1447 = vmul.f32 %v1446, %v1446
        %v1448 = vsel %vm1118, %v1447, 0.0
        %1449 = vadd.xlane.f32.xlu0 %v1448
        %v1450 = vpop.xlane.xlu0 %1449
        %v1451 = vmul.f32 %v1450, %v1444
        %v1452 = vadd.f32 %v1451, 1e-05
        %v1453 = vrsqrt.pop %v1452
        %v1454 = vmul.f32 %v1453, %v1452
        %v1455 = vmul.f32 %v1454, %v1453
        %v1456 = vmul.f32 0.5, %v1455
        %v1457 = vsub.f32 1.5, %v1456
        %v1458 = vmul.f32 %v1453, %v1457
        %vm1459 = vweird.f32 %v1452
        %vm1460 = vweird.f32 %v1453
        %vm1461 = vmor %vm1459, %vm1460
        %v1462 = vsel %vm1461, %v1453, %v1458
        %v1463 = vmul.f32 %v1446, %v1462
        %v1465 = vperm.slane %v1433, 0
        %v1467 = vmul.f32 %v1463, %v1465
        %v1469 = vperm.slane %v1434, 0
        %v1471 = vadd.f32 %v1467, %v1469
        %v1472 = vpack.c.bf16 %v1471, %v1471
        %v1473 = vld [vmem:[%s1041] sm:$0xf]
        %v1474 = vld [vmem:[%s1041 + $0x4] sm:$0xf]
        %v1475 = vld [vmem:[%s1041 + $0x8] sm:$0xf]
        %v1476 = vld [vmem:[%s1041 + $0xc] sm:$0xf]
        %v1477 = vld [vmem:[%s888] sm:$0x1]
        %v1479 = vperm.slane %v1477, 0
        %v1485 = vunpack.c.l.b16 %v1473
        %v1486 = vunpack.c.l.b16 %v1474
        %v1487 = vunpack.c.l.b16 %v1475
        %v1488 = vunpack.c.l.b16 %v1476
        %v1489 = vpack.c.b16 %v1486, %v1485
        %v1490 = vpack.c.b16 %v1488, %v1487
        %v1494 = vsel %vm1118, %v1472, 0
        %1496 = vmatpush.bf16.msra.mxu0 0
        %1497 = vmatpush.bf16.msra.mxu0 0
        %1498 = vmatpush.bf16.msra.mxu0 0
        %1499 = vmatpush.bf16.msra.mxu0 0
        %1500 = vmatpush.bf16.msra.mxu0 0
        %1501 = vmatpush.bf16.msra.mxu0 0
        %1502 = vmatpush.bf16.msra.mxu0 %v1490
        %1503 = vmatpush.bf16.msra.mxu0 %v1489
        %1504 = vmatmul.bf16.gmra.mxu0 %v1494
        %v1505 = vpop.f32.mrf.mxu0
        %v1506 = vadd.f32 %v1479, %v1505
        %v1507 = vpop.f32.mrf.mxu0
        %1508 = vdwg.mxu0
        %v1509 = vmax.f32 %v1506, 0.0
        %v1510 = vpack.c.bf16 %v1509, %v1509
        %v1511 = vld [vmem:[%s1046] sm:$0xf]
        %v1512 = vld [vmem:[%s1046 + $0x4] sm:$0xf]
        %v1513 = vld [vmem:[%s1046 + $0x8] sm:$0xf]
        %v1514 = vld [vmem:[%s1046 + $0xc] sm:$0xf]
        %v1515 = vld [vmem:[%s1046 + $0x10] sm:$0xf]
        %v1516 = vld [vmem:[%s1046 + $0x14] sm:$0xf]
        %v1517 = vld [vmem:[%s1046 + $0x18] sm:$0xf]
        %v1518 = vld [vmem:[%s1046 + $0x1c] sm:$0xf]
        %v1519 = vld [vmem:[%s897] sm:$0x1]
        %v1521 = vperm.slane %v1519, 0
        %v1531 = vunpack.c.l.b16 %v1511
        %v1532 = vunpack.c.l.b16 %v1512
        %v1533 = vunpack.c.l.b16 %v1513
        %v1534 = vunpack.c.l.b16 %v1514
        %v1535 = vunpack.c.l.b16 %v1515
        %v1536 = vunpack.c.l.b16 %v1516
        %v1537 = vunpack.c.l.b16 %v1517
        %v1538 = vunpack.c.l.b16 %v1518
        %v1539 = vpack.c.b16 %v1532, %v1531
        %v1540 = vpack.c.b16 %v1534, %v1533
        %v1541 = vpack.c.b16 %v1536, %v1535
        %v1542 = vpack.c.b16 %v1538, %v1537
        %vm1547 = vcmask 523264
        %v1549 = vsel %vm1547, %v1510, 0
        %1551 = vmatpush.bf16.msra.mxu0 0
        %1552 = vmatpush.bf16.msra.mxu0 0
        %1553 = vmatpush.bf16.msra.mxu0 0
        %1554 = vmatpush.bf16.msra.mxu0 0
        %1555 = vmatpush.bf16.msra.mxu0 %v1542
        %1556 = vmatpush.bf16.msra.mxu0 %v1541
        %1557 = vmatpush.bf16.msra.mxu0 %v1540
        %1558 = vmatpush.bf16.msra.mxu0 %v1539
        %1559 = vmatmul.bf16.gmra.mxu0 %v1549
        %v1560 = vpop.f32.mrf.mxu0
        %v1561 = vadd.f32 %v1521, %v1560
        %v1562 = vpop.f32.mrf.mxu0
        %1563 = vdwg.mxu0
        %v1564 = vadd.f32 %v1471, %v1561
        %v1565 = vld [vmem:[%s1049] sm:$0x1]
        %v1566 = vld [vmem:[%s906] sm:$0x1]
        %v1567 = vsel %vm1118, %v1564, 0.0
        %1568 = vadd.xlane.f32.xlu0 %v1567
        %v1569 = vpop.xlane.xlu0 %1568
        %v1570 = vmul.f32 %v1569, %v1444
        %v1571 = vsub.f32 %v1564, %v1570
        %v1572 = vmul.f32 %v1571, %v1571
        %v1573 = vsel %vm1118, %v1572, 0.0
        %1574 = vadd.xlane.f32.xlu0 %v1573
        %v1575 = vpop.xlane.xlu0 %1574
        %v1576 = vmul.f32 %v1575, %v1444
        %v1577 = vadd.f32 %v1576, 1e-05
        %v1578 = vrsqrt.pop %v1577
        %v1579 = vmul.f32 %v1578, %v1577
        %v1580 = vmul.f32 %v1579, %v1578
        %v1581 = vmul.f32 0.5, %v1580
        %v1582 = vsub.f32 1.5, %v1581
        %v1583 = vmul.f32 %v1578, %v1582
        %vm1584 = vweird.f32 %v1577
        %vm1585 = vweird.f32 %v1578
        %vm1586 = vmor %vm1584, %vm1585
        %v1587 = vsel %vm1586, %v1578, %v1583
        %v1588 = vmul.f32 %v1571, %v1587
        %v1590 = vperm.slane %v1565, 0
        %v1592 = vmul.f32 %v1588, %v1590
        %v1594 = vperm.slane %v1566, 0
        %v1596 = vadd.f32 %v1592, %v1594
        %1597 = vst.msk [vmem:[#allocation2] sm:$0xff] %vm1118, %v1596
        %p1598 = scmp.eq.s32.totalorder %s44, 1
        // Predicated region
        $region153: #{tpu_custom_call.1} parent=99 // pred_check
          %p1599 = pneg %p1598
        $region154: #{tpu_custom_call.1} parent=99 // pred_check_branch
          %1601 = sbr.rel (%p1599) target = $region156
        $region155: #{tpu_custom_call.1} parent=99 // pred_region
          %v1602 = vpack.c.bf16 %v1596, %v1596
          %v1603 = vld [vmem:[#allocation19] sm:$0xf]
          %v1604 = vld [vmem:[#allocation19 + $0x4] sm:$0xf]
          %v1605 = vld [vmem:[#allocation19 + $0x8] sm:$0xf]
          %v1606 = vld [vmem:[#allocation19 + $0xc] sm:$0xf]
          %v1607 = vld [vmem:[%s19] sm:$0x1]
          %v1609 = vperm.slane %v1607, 0
          %v1615 = vunpack.c.l.b16 %v1603
          %v1616 = vunpack.c.l.b16 %v1604
          %v1617 = vunpack.c.l.b16 %v1605
          %v1618 = vunpack.c.l.b16 %v1606
          %v1619 = vpack.c.b16 %v1616, %v1615
          %v1620 = vpack.c.b16 %v1618, %v1617
          %v1624 = vsel %vm1118, %v1602, 0
          %1626 = vmatpush.bf16.msra.mxu0 0
          %1627 = vmatpush.bf16.msra.mxu0 0
          %1628 = vmatpush.bf16.msra.mxu0 0
          %1629 = vmatpush.bf16.msra.mxu0 0
          %1630 = vmatpush.bf16.msra.mxu0 0
          %1631 = vmatpush.bf16.msra.mxu0 0
          %1632 = vmatpush.bf16.msra.mxu0 %v1620
          %1633 = vmatpush.bf16.msra.mxu0 %v1619
          %1634 = vmatmul.bf16.gmra.mxu0 %v1624
          %v1635 = vpop.f32.mrf.mxu0
          %v1636 = vadd.f32 %v1609, %v1635
          %v1637 = vpop.f32.mrf.mxu0
          %1638 = vdwg.mxu0
          %1639 = vst [vmem:[%s1022] sm:$0xff] %v1636
        $region156: #{tpu_custom_call.1} parent=99 // pred_fallthru
          _
        %s1640 = sand.u32 %s549, 1
        %s1641 = scalar_lea.sflag [#allocation6], %s1640
        %s1642 = sand.u32 %s549, 1
        %s1643 = smul.addr %s1642, 8
        %s1644 = scalar_lea.vmem [#allocation20], %s1643
        // Predicated region
        $region157: #{tpu_custom_call.1} parent=99 // pred_check
          %p1645 = pneg %p559
        $region158: #{tpu_custom_call.1} parent=99 // pred_check_branch
          %1647 = sbr.rel (%p1645) target = $region160
        $region159: #{tpu_custom_call.1} parent=99 // pred_region
          %1649 = vsyncadd %s1641, 0
          %s1650 = smul.addr %s43, 8
          %s1651 = scalar_lea.hbm %s20, %s1650
          %s1653 = sshll.u32 %s1644, 4
          %s1654 = int_to_ptr.vmem [resolvable:$true] %s1653
          %s1655 = sshll.u32 %s1651, 4
          %s1656 = int_to_ptr.hbm [resolvable:$true] %s1655
          %1658 = dma.vmem_to_hbm [thread:$0]  %s1654, 128, %s1656, %s1641
        $region160: #{tpu_custom_call.1} parent=99 // pred_fallthru
          _
      $region100: #{tpu_custom_call.1} parent=5 // pred_fallthru
        _
      %p1659 = scmp.le.s32.totalorder 2, %s34
      // Predicated region
      $region161: #{tpu_custom_call.1} parent=5 // pred_check
        %p1660 = pneg %p1659
      $region162: #{tpu_custom_call.1} parent=5 // pred_check_branch
        %1662 = sbr.rel (%p1660) target = $region164
      $region163: #{tpu_custom_call.1} parent=5 // pred_region
        %s1663 = ssub.s32 %s34, 2
        // Predicated region
        $region165: #{tpu_custom_call.1} parent=163 // pred_check
          %p1664 = pneg %p565
        $region166: #{tpu_custom_call.1} parent=163 // pred_check_branch
          %1666 = sbr.rel (%p1664) target = $region168
        $region167: #{tpu_custom_call.1} parent=163 // pred_region
          %s1667 = sand.u32 %s550, 1
          %s1668 = scalar_lea.sflag [#allocation6], %s1667
          %s1669 = sand.u32 %s550, 1
          %s1670 = smul.addr %s1669, 8
          %s1671 = scalar_lea.vmem [#allocation20], %s1670
          %1673 = dma.done %s1668, 128
        $region168: #{tpu_custom_call.1} parent=163 // pred_fallthru
          _
      $region164: #{tpu_custom_call.1} parent=5 // pred_fallthru
        _
    $region6: #{tpu_custom_call.1} parent=1 // loop_footer
      %s38 = sadd.s32 1, %s34
    $region7: #{tpu_custom_call.1} parent=1 // loop_footer_branch
      %33 = sbr.rel target = $region3
    $region8: #{tpu_custom_call.1} parent=1 // loop_exit
      _
    %1674 = vsyncpa [#allocation5], 1
    %s1675 = scalar_lea.sflag [#allocation5], 1
    %1676 = vsyncpa %s1675, 1
    %1677 = vsyncpa [#allocation8], 1
    %s1678 = scalar_lea.sflag [#allocation8], 1
    %1679 = vsyncpa %s1678, 1
    %1680 = vsyncpa [#allocation11], 1
    %1681 = vsyncpa [#allocation6], 1
    %s1682 = scalar_lea.sflag [#allocation6], 1
    %1683 = vsyncpa %s1682, 1

</llo_original>
